<compile_context>
chip_gen: v6e
topology: v6e:2x2x1
jax: 0.10.0
libtpu: 0.0.40
codegen_flags: <defaults>
</compile_context>

<pallas_src>
import numpy as np
import jax
import jax.numpy as jnp
from jax.experimental import pallas as pl
from jax.experimental.pallas import tpu as pltpu


# ----------------------------------------------------------------------------
# Pallas kernel 1: bilinear upsample (align_corners=True) as two flat GEMMs
# ----------------------------------------------------------------------------
def _bilinear_matrix(n_in, n_out):
    """Interpolation matrix W (n_out, n_in) s.t. out = W @ in, align_corners=True."""
    W = np.zeros((n_out, n_in), np.float32)
    if n_out == 1 or n_in == 1:
        W[:, 0] = 1.0
        return W
    scale = (n_in - 1) / (n_out - 1)
    for i in range(n_out):
        src = i * scale
        i0 = min(int(np.floor(src)), n_in - 1)
        i1 = min(i0 + 1, n_in - 1)
        f = src - i0
        W[i, i0] += 1.0 - f
        W[i, i1] += f
    return W


def _upsample_kernel(x_ref, whb_ref, wwt_ref, o_ref):
    # x_ref  : (nc*Hin, Win)        bf16 -- nc channels flattened along rows
    # whb_ref: (nc*Hout, nc*Hin)    bf16 -- block-diagonal height-interp matrix
    # wwt_ref: (Win, Wout)          bf16 -- width-interp matrix (transposed)
    # o_ref  : (nc*Hout, Wout)      bf16
    # Height interpolation first (reordered GEMMs: runs the big block-diag GEMM at
    # N=Win instead of N=Wout -> ~2.2x fewer MXU MACs).
    tmp = jnp.dot(whb_ref[...], x_ref[...],
                  preferred_element_type=jnp.float32)              # (nc*Hout, Win)
    out = jnp.dot(tmp.astype(jnp.bfloat16), wwt_ref[...],
                  preferred_element_type=jnp.float32)              # (nc*Hout, Wout)
    o_ref[...] = out.astype(o_ref.dtype)                           # single 2D store


def upsample_bilinear_x(x, scale):
    """x: (B, C, H, W) float32 -> (B, C, H*scale, W*scale) bf16, align_corners=True."""
    B, C, Hin, Win = x.shape
    Hout, Wout = Hin * scale, Win * scale
    BC = B * C

    # 2 parallel grid steps when possible (shards across v7x's two TensorCores while
    # keeping the block-diag matrix small on single-TC v5e/v6e); otherwise 1 step.
    n_steps = 2 if (BC % 2 == 0 and BC >= 2) else 1
    nc = BC // n_steps

    wh_np = _bilinear_matrix(Hin, Hout)                            # (Hout, Hin)
    ww_np = _bilinear_matrix(Win, Wout)                            # (Wout, Win)
    # Block-diagonal height matrix: applies wh to each of the nc channels of the
    # flattened (nc*Hin, Win) block with a single GEMM.
    whb = jnp.asarray(np.kron(np.eye(nc, dtype=np.float32), wh_np), jnp.bfloat16)
    wwt = jnp.asarray(ww_np.T, jnp.bfloat16)                       # (Win, Wout)

    xf = x.reshape(BC * Hin, Win).astype(jnp.bfloat16)             # rows = channel-major

    out = pl.pallas_call(
        _upsample_kernel,
        out_shape=jax.ShapeDtypeStruct((BC * Hout, Wout), jnp.bfloat16),
        grid=(n_steps,),
        in_specs=[
            pl.BlockSpec((nc * Hin, Win), lambda i: (i, 0)),
            pl.BlockSpec((nc * Hout, nc * Hin), lambda i: (0, 0)),
            pl.BlockSpec((Win, Wout), lambda i: (0, 0)),
        ],
        out_specs=pl.BlockSpec((nc * Hout, Wout), lambda i: (i, 0)),
        compiler_params=pltpu.CompilerParams(dimension_semantics=("parallel",)),
    )(xf, whb, wwt)
    return out.reshape(B, C, Hout, Wout)


# ----------------------------------------------------------------------------
# Pallas kernel 2: fused AvgPool -> Linear -> ReLU -> Linear -> Softmax(dim=1)
# ----------------------------------------------------------------------------
def _pool_head_softmax_kernel(x_ref, w1_ref, b1_ref, w2_ref, b2_ref, o_ref):
    # x_ref: (B, S, 512) bf16 -- D=512 lane-dense; adaptive avg-pool fused here as a
    # sum over S (the 1/S scale is folded into w1 by the wrapper).
    feats = jnp.sum(x_ref[...].astype(jnp.float32), axis=1)                 # (B, 512)
    h = jnp.dot(feats.astype(jnp.bfloat16), w1_ref[...],
                preferred_element_type=jnp.float32) + b1_ref[...]
    h = jnp.maximum(h, 0.0)
    logits = jnp.dot(h.astype(jnp.bfloat16), w2_ref[...],
                     preferred_element_type=jnp.float32) + b2_ref[...]
    m = jnp.max(logits, axis=1, keepdims=True)
    e = jnp.exp(logits - m)
    s = jnp.sum(e, axis=1, keepdims=True)
    o_ref[...] = e / s       # exact normalization (rows sum to 1 to f32 rounding)


def pooled_head_softmax(fmap, w1, b1, w2, b2):
    """fmap: (B, S, 512) -> softmax(relu(mean_S(fmap) @ w1 + b1) @ w2 + b2)."""
    B, S, D = fmap.shape
    H = w1.shape[1]
    C = w2.shape[1]
    w1s = (w1 * (1.0 / np.float32(S))).astype(jnp.bfloat16)   # fold pooling 1/S into w1
    w2b = w2.astype(jnp.bfloat16)
    return pl.pallas_call(
        _pool_head_softmax_kernel,
        out_shape=jax.ShapeDtypeStruct((B, C), jnp.float32),
        grid=(1,),
        in_specs=[
            pl.BlockSpec((B, S, D), lambda i: (0, 0, 0)),
            pl.BlockSpec((D, H), lambda i: (0, 0)),
            pl.BlockSpec((1, H), lambda i: (0, 0)),
            pl.BlockSpec((H, C), lambda i: (0, 0)),
            pl.BlockSpec((1, C), lambda i: (0, 0)),
        ],
        out_specs=pl.BlockSpec((B, C), lambda i: (0, 0)),
    )(fmap, w1s, b1.reshape(1, -1), w2b, b2.reshape(1, -1))


# ----------------------------------------------------------------------------
# Plain-JAX ResNet18 backbone (eval mode, deterministic init, NHWC + bf16)
# ----------------------------------------------------------------------------
def _conv(x, w, stride, pad):
    # x: (B, H, W, C) bf16, w: (kh, kw, Cin, Cout) bf16 -> f32 accumulation.
    return jax.lax.conv_general_dilated(
        x, w, (stride, stride), ((pad, pad), (pad, pad)),
        dimension_numbers=("NHWC", "HWIO", "NHWC"),
        preferred_element_type=jnp.float32)


def _bn(x, gamma, beta, eps=1e-5):
    # eval-mode batchnorm with running_mean=0, running_var=1 (channels-last).
    scale = gamma / jnp.sqrt(1.0 + eps)
    return x * scale + beta


def _he_conv(key, out_c, in_c, k):
    std = np.sqrt(2.0 / (in_c * k * k))
    w = jax.random.normal(key, (k, k, in_c, out_c), jnp.float32) * std    # HWIO
    return w.astype(jnp.bfloat16)


def init_resnet18_params(key):
    keys = iter(jax.random.split(key, 64))
    params = {
        "conv1": _he_conv(next(keys), 64, 3, 7),
        "bn1": (jnp.ones(64, jnp.float32), jnp.zeros(64, jnp.float32)),
        "layers": [],
    }
    in_c = 64
    for out_c, stride in [(64, 1), (128, 2), (256, 2), (512, 2)]:
        blocks = []
        for b in range(2):  # resnet18: 2 basic blocks per stage
            s = stride if b == 0 else 1
            blk = {
                "stride": s,
                "conv1": _he_conv(next(keys), out_c, in_c, 3),
                "bn1": (jnp.ones(out_c, jnp.float32), jnp.zeros(out_c, jnp.float32)),
                "conv2": _he_conv(next(keys), out_c, out_c, 3),
                "bn2": (jnp.ones(out_c, jnp.float32), jnp.zeros(out_c, jnp.float32)),
            }
            if s != 1 or in_c != out_c:
                blk["down_conv"] = _he_conv(next(keys), out_c, in_c, 1)
                blk["down_bn"] = (jnp.ones(out_c, jnp.float32), jnp.zeros(out_c, jnp.float32))
            blocks.append(blk)
            in_c = out_c
        params["layers"].append(blocks)
    return params


def resnet18_feature_map(x, p):
    """(B,224,224,3) bf16 NHWC -> (B,7,7,512) bf16 (avg-pool fused into head kernel)."""
    x = jax.nn.relu(_bn(_conv(x, p["conv1"], 2, 3), *p["bn1"]))          # f32
    x = jax.lax.reduce_window(
        x, -jnp.inf, jax.lax.max,
        (1, 3, 3, 1), (1, 2, 2, 1), ((0, 0), (1, 1), (1, 1), (0, 0)))
    x = x.astype(jnp.bfloat16)
    for blocks in p["layers"]:
        for blk in blocks:
            out = jax.nn.relu(
                _bn(_conv(x, blk["conv1"], blk["stride"], 1), *blk["bn1"])
            ).astype(jnp.bfloat16)
            out = _bn(_conv(out, blk["conv2"], 1, 1), *blk["bn2"])        # f32
            if "down_conv" in blk:
                identity = _bn(_conv(x, blk["down_conv"], blk["stride"], 0),
                               *blk["down_bn"])                           # f32
            else:
                identity = x.astype(jnp.float32)
            x = jax.nn.relu(out + identity).astype(jnp.bfloat16)
    return x


# ----------------------------------------------------------------------------
# Full TwoLayerNN forward
# ----------------------------------------------------------------------------
def twolayer_nn_forward(images, params):
    B = images.shape[0]
    up = upsample_bilinear_x(images, 7)                        # (B, 3, 224, 224) bf16
    up = up.reshape(B, 3, 224, 224)                            # mirrors .view(B,3,224,224)
    # TODO(synk): the upsample kernel could emit NHWC directly; the transpose here is
    # tiny (~0.6 MB bf16) and handled by XLA.
    up_nhwc = jnp.transpose(up, (0, 2, 3, 1))                  # NHWC for bf16 backbone
    fmap = resnet18_feature_map(up_nhwc, params["resnet"])     # (B, 7, 7, 512) bf16
    fmap = fmap.reshape(B, 49, 512)                            # lane-dense (D=512 last)
    return pooled_head_softmax(
        fmap, params["w1"], params["b1"], params["w2"], params["b2"])


if __name__ == "__main__":
    key = jax.random.PRNGKey(0)
    k_img, k_res, k_w1, k_b1, k_w2, k_b2 = jax.random.split(key, 6)

    B, C, H, W = 2, 3, 32, 32          # 32 * 7 = 224 -> matches the .view(B,3,224,224)
    hidden_dim, n_classes = 32, 10

    x = jax.random.normal(k_img, (B, C, H, W), jnp.float32)

    # fc head params (PyTorch Linear-style uniform init, deterministic)
    lim1 = 1.0 / np.sqrt(512.0)
    lim2 = 1.0 / np.sqrt(float(hidden_dim))
    params = {
        "resnet": init_resnet18_params(k_res),
        "w1": jax.random.uniform(k_w1, (512, hidden_dim), jnp.float32, -lim1, lim1),
        "b1": jax.random.uniform(k_b1, (hidden_dim,), jnp.float32, -lim1, lim1),
        "w2": jax.random.uniform(k_w2, (hidden_dim, n_classes), jnp.float32, -lim2, lim2),
        "b2": jax.random.uniform(k_b2, (n_classes,), jnp.float32, -lim2, lim2),
    }

    forward = jax.jit(lambda imgs: twolayer_nn_forward(imgs, params))
    scores = jax.block_until_ready(forward(x))

    scores_np = np.asarray(scores)
    assert scores_np.shape == (B, n_classes)
    assert np.all(np.isfinite(scores_np)) and np.all(scores_np >= 0.0)
    # softmax uses exact normalization -> rows sum to 1 up to f32 rounding
    assert np.allclose(scores_np.sum(axis=1), 1.0, atol=1e-3)
    print("KERNEL_OK")
</pallas_src>

<mosaic_0001>
module attributes {stable_mosaic.version = 11 : i64} {
  func.func @_upsample_kernel(%arg0: i32, %arg1: memref<96x32xbf16, #tpu.memory_space<vmem>>, %arg2: memref<672x96xbf16, #tpu.memory_space<vmem>>, %arg3: memref<32x224xbf16, #tpu.memory_space<vmem>>, %arg4: memref<672x224xbf16, #tpu.memory_space<vmem>>) attributes {dimension_semantics = [#tpu.dimension_semantics<parallel>], iteration_bounds = array<i64: 2>, scalar_prefetch = 0 : i64, scratch_operands = 0 : i64, tpu.core_type = #tpu.core_type<tc>, window_params = [{transform_indices = @transform_0, window_bounds = array<i64: 96, 32>}, {pipeline_mode = #tpu.pipeline_mode<synchronous>, transform_indices = @transform_1, window_bounds = array<i64: 672, 96>}, {pipeline_mode = #tpu.pipeline_mode<synchronous>, transform_indices = @transform_2, window_bounds = array<i64: 32, 224>}, {transform_indices = @transform_3, window_bounds = array<i64: 672, 224>}]} {
    %c0 = arith.constant 0 : index
    %c0_0 = arith.constant 0 : index
    %0 = vector.load %arg2[%c0, %c0_0] : memref<672x96xbf16, #tpu.memory_space<vmem>>, vector<672x96xbf16>
    %c0_1 = arith.constant 0 : index
    %c0_2 = arith.constant 0 : index
    %1 = vector.load %arg1[%c0_1, %c0_2] : memref<96x32xbf16, #tpu.memory_space<vmem>>, vector<96x32xbf16>
    %cst = arith.constant dense<0.000000e+00> : vector<672x32xf32>
    %2 = tpu.matmul %0, %1, %cst {dimension_numbers = #tpu.dot_dimension_numbers<[1], [0], [0], [1], [0, 0, 1, 1], [], []>} : vector<672x96xbf16>, vector<96x32xbf16>, vector<672x32xf32> -> vector<672x32xf32>
    %3 = arith.truncf %2 : vector<672x32xf32> to vector<672x32xbf16>
    %c0_3 = arith.constant 0 : index
    %c0_4 = arith.constant 0 : index
    %4 = vector.load %arg3[%c0_3, %c0_4] : memref<32x224xbf16, #tpu.memory_space<vmem>>, vector<32x224xbf16>
    %cst_5 = arith.constant dense<0.000000e+00> : vector<672x224xf32>
    %5 = tpu.matmul %3, %4, %cst_5 {dimension_numbers = #tpu.dot_dimension_numbers<[1], [0], [0], [1], [0, 0, 1, 1], [], []>} : vector<672x32xbf16>, vector<32x224xbf16>, vector<672x224xf32> -> vector<672x224xf32>
    %6 = arith.truncf %5 : vector<672x224xf32> to vector<672x224xbf16>
    %c0_6 = arith.constant 0 : index
    %c0_7 = arith.constant 0 : index
    %7 = vector.load %arg4[%c0_6, %c0_7] : memref<672x224xbf16, #tpu.memory_space<vmem>>, vector<672x224xbf16>
    tpu.vector_store %arg4[%c0_6, %c0_7], %6 {strides = array<i32>} : memref<672x224xbf16, #tpu.memory_space<vmem>>, vector<672x224xbf16>,
    return
  }
  func.func @transform_0(%arg0: i32) -> (i32, i32) {
    %c0_i32 = arith.constant 0 : i32
    %c0_i32_0 = arith.constant 0 : i32
    return %arg0, %c0_i32 : i32, i32
  }
  func.func @transform_1(%arg0: i32) -> (i32, i32) {
    %c0_i32 = arith.constant 0 : i32
    %c0_i32_0 = arith.constant 0 : i32
    %c0_i32_1 = arith.constant 0 : i32
    return %c0_i32, %c0_i32_0 : i32, i32
  }
  func.func @transform_2(%arg0: i32) -> (i32, i32) {
    %c0_i32 = arith.constant 0 : i32
    %c0_i32_0 = arith.constant 0 : i32
    %c0_i32_1 = arith.constant 0 : i32
    return %c0_i32, %c0_i32_0 : i32, i32
  }
  func.func @transform_3(%arg0: i32) -> (i32, i32) {
    %c0_i32 = arith.constant 0 : i32
    %c0_i32_0 = arith.constant 0 : i32
    return %arg0, %c0_i32 : i32, i32
  }
}

module attributes {stable_mosaic.version = 11 : i64} {
  func.func @_pool_head_softmax_kernel(%arg0: i32, %arg1: memref<2x49x512xbf16, #tpu.memory_space<vmem>>, %arg2: memref<512x32xbf16, #tpu.memory_space<vmem>>, %arg3: memref<1x32xf32, #tpu.memory_space<vmem>>, %arg4: memref<32x10xbf16, #tpu.memory_space<vmem>>, %arg5: memref<1x10xf32, #tpu.memory_space<vmem>>, %arg6: memref<2x10xf32, #tpu.memory_space<vmem>>) attributes {dimension_semantics = [#tpu.dimension_semantics<arbitrary>], iteration_bounds = array<i64: 1>, scalar_prefetch = 0 : i64, scratch_operands = 0 : i64, tpu.core_type = #tpu.core_type<tc>, window_params = [{pipeline_mode = #tpu.pipeline_mode<synchronous>, transform_indices = @transform_0, window_bounds = array<i64: 2, 49, 512>}, {pipeline_mode = #tpu.pipeline_mode<synchronous>, transform_indices = @transform_1, window_bounds = array<i64: 512, 32>}, {pipeline_mode = #tpu.pipeline_mode<synchronous>, transform_indices = @transform_2, window_bounds = array<i64: 1, 32>}, {pipeline_mode = #tpu.pipeline_mode<synchronous>, transform_indices = @transform_3, window_bounds = array<i64: 32, 10>}, {pipeline_mode = #tpu.pipeline_mode<synchronous>, transform_indices = @transform_4, window_bounds = array<i64: 1, 10>}, {pipeline_mode = #tpu.pipeline_mode<synchronous>, transform_indices = @transform_5, window_bounds = array<i64: 2, 10>}]} {
    %c0 = arith.constant 0 : index
    %c0_0 = arith.constant 0 : index
    %c0_1 = arith.constant 0 : index
    %0 = vector.load %arg1[%c0, %c0_0, %c0_1] : memref<2x49x512xbf16, #tpu.memory_space<vmem>>, vector<2x49x512xbf16>
    %1 = arith.extf %0 : vector<2x49x512xbf16> to vector<2x49x512xf32>
    %cst = arith.constant dense<0.000000e+00> : vector<2x512xf32>
    %2 = vector.multi_reduction <add>, %1, %cst [1] : vector<2x49x512xf32> to vector<2x512xf32>
    %3 = arith.truncf %2 : vector<2x512xf32> to vector<2x512xbf16>
    %c0_2 = arith.constant 0 : index
    %c0_3 = arith.constant 0 : index
    %4 = vector.load %arg2[%c0_2, %c0_3] : memref<512x32xbf16, #tpu.memory_space<vmem>>, vector<512x32xbf16>
    %cst_4 = arith.constant dense<0.000000e+00> : vector<2x32xf32>
    %5 = tpu.matmul %3, %4, %cst_4 {dimension_numbers = #tpu.dot_dimension_numbers<[1], [0], [0], [1], [0, 0, 1, 1], [], []>} : vector<2x512xbf16>, vector<512x32xbf16>, vector<2x32xf32> -> vector<2x32xf32>
    %c0_5 = arith.constant 0 : index
    %c0_6 = arith.constant 0 : index
    %6 = vector.load %arg3[%c0_5, %c0_6] : memref<1x32xf32, #tpu.memory_space<vmem>>, vector<1x32xf32>
    %7 = vector.broadcast %6 : vector<1x32xf32> to vector<2x32xf32>
    %8 = arith.addf %5, %7 : vector<2x32xf32>
    %cst_7 = arith.constant 0.000000e+00 : f32
    %9 = vector.broadcast %cst_7 : f32 to vector<2x32xf32>
    %10 = arith.maximumf %8, %9 : vector<2x32xf32>
    %11 = arith.truncf %10 : vector<2x32xf32> to vector<2x32xbf16>
    %c0_8 = arith.constant 0 : index
    %c0_9 = arith.constant 0 : index
    %12 = vector.load %arg4[%c0_8, %c0_9] : memref<32x10xbf16, #tpu.memory_space<vmem>>, vector<32x10xbf16>
    %cst_10 = arith.constant dense<0.000000e+00> : vector<2x10xf32>
    %13 = tpu.matmul %11, %12, %cst_10 {dimension_numbers = #tpu.dot_dimension_numbers<[1], [0], [0], [1], [0, 0, 1, 1], [], []>} : vector<2x32xbf16>, vector<32x10xbf16>, vector<2x10xf32> -> vector<2x10xf32>
    %c0_11 = arith.constant 0 : index
    %c0_12 = arith.constant 0 : index
    %14 = vector.load %arg5[%c0_11, %c0_12] : memref<1x10xf32, #tpu.memory_space<vmem>>, vector<1x10xf32>
    %15 = vector.broadcast %14 : vector<1x10xf32> to vector<2x10xf32>
    %16 = arith.addf %13, %15 : vector<2x10xf32>
    %cst_13 = arith.constant dense<0xFF800000> : vector<2xf32>
    %17 = vector.multi_reduction <maximumf>, %16, %cst_13 [1] : vector<2x10xf32> to vector<2xf32>
    %18 = vector.shape_cast %17 : vector<2xf32> to vector<2x1xf32>
    %19 = vector.broadcast %18 : vector<2x1xf32> to vector<2x10xf32>
    %20 = arith.subf %16, %19 : vector<2x10xf32>
    %21 = math.exp %20 : vector<2x10xf32>
    %cst_14 = arith.constant dense<0.000000e+00> : vector<2xf32>
    %22 = vector.multi_reduction <add>, %21, %cst_14 [1] : vector<2x10xf32> to vector<2xf32>
    %23 = vector.shape_cast %22 : vector<2xf32> to vector<2x1xf32>
    %24 = vector.broadcast %23 : vector<2x1xf32> to vector<2x10xf32>
    %25 = arith.divf %21, %24 : vector<2x10xf32>
    %c0_15 = arith.constant 0 : index
    %c0_16 = arith.constant 0 : index
    %26 = vector.load %arg6[%c0_15, %c0_16] : memref<2x10xf32, #tpu.memory_space<vmem>>, vector<2x10xf32>
    tpu.vector_store %arg6[%c0_15, %c0_16], %25 {strides = array<i32>} : memref<2x10xf32, #tpu.memory_space<vmem>>, vector<2x10xf32>,
    return
  }
  func.func @transform_0(%arg0: i32) -> (i32, i32, i32) {
    %c0_i32 = arith.constant 0 : i32
    %c0_i32_0 = arith.constant 0 : i32
    %c0_i32_1 = arith.constant 0 : i32
    %c0_i32_2 = arith.constant 0 : i32
    return %c0_i32, %c0_i32_0, %c0_i32_1 : i32, i32, i32
  }
  func.func @transform_1(%arg0: i32) -> (i32, i32) {
    %c0_i32 = arith.constant 0 : i32
    %c0_i32_0 = arith.constant 0 : i32
    %c0_i32_1 = arith.constant 0 : i32
    return %c0_i32, %c0_i32_0 : i32, i32
  }
  func.func @transform_2(%arg0: i32) -> (i32, i32) {
    %c0_i32 = arith.constant 0 : i32
    %c0_i32_0 = arith.constant 0 : i32
    %c0_i32_1 = arith.constant 0 : i32
    return %c0_i32, %c0_i32_0 : i32, i32
  }
  func.func @transform_3(%arg0: i32) -> (i32, i32) {
    %c0_i32 = arith.constant 0 : i32
    %c0_i32_0 = arith.constant 0 : i32
    %c0_i32_1 = arith.constant 0 : i32
    return %c0_i32, %c0_i32_0 : i32, i32
  }
  func.func @transform_4(%arg0: i32) -> (i32, i32) {
    %c0_i32 = arith.constant 0 : i32
    %c0_i32_0 = arith.constant 0 : i32
    %c0_i32_1 = arith.constant 0 : i32
    return %c0_i32, %c0_i32_0 : i32, i32
  }
  func.func @transform_5(%arg0: i32) -> (i32, i32) {
    %c0_i32 = arith.constant 0 : i32
    %c0_i32_0 = arith.constant 0 : i32
    %c0_i32_1 = arith.constant 0 : i32
    return %c0_i32, %c0_i32_0 : i32, i32
  }
}

</mosaic_0001>

<llo_original>
// kernel: _lambda_.2
$region0: #{_lambda_.2}
  #allocation0 [shape = 'u32[]', space=smem, size = 0x4, offset = 0x4, fixed_abs, tag = 'smem constant byte address 0x4 - core index']
  #allocation1 [shape = 'u32[144,128]{1,0:T(1,128)}', space=vmem, size = 0x12000, scoped, tag = 'internal scratch']
  %s0 = inlined_call_operand.vmem [shape: bf16[192,32], index: 0, kind: input, shape index: {}]
  %s1 = inlined_call_operand.hbm [shape: bf16[672,96], index: 1, kind: input, shape index: {}]
  %s2 = inlined_call_operand.hbm [shape: bf16[32,224], index: 2, kind: input, shape index: {}]
  %s3 = inlined_call_operand.vmem [shape: bf16[1344,224], index: 3, kind: output, shape index: {}]
  %s4 = sld [smem:[#allocation0]]
  $region53: #{_lambda_.2} parent=0
    _
  %s6 = ssub.s32 1, %s4
  %s7 = scalar_select 0, %s6, %s4
  $region1: #{_lambda_.2} parent=0
    #allocation2 [shape = 'u8[172032]{0}', space=vmem, size = 0x2a000, scoped, tag = 'input window, operand 1, single buffered']
    #allocation3 [shape = 's32[2]{0}', space=sflag, size = 0x8, scoped, tag = 'scoped memory for _lambda_.2']
    #allocation4 [shape = 'u8[16384]{0}', space=vmem, size = 0x4000, scoped, tag = 'input window, operand 2, single buffered']
    #allocation5 [shape = 's32[1]{0}', space=sflag, size = 0x4, scoped, tag = 'scoped memory for _lambda_.2']
    %8 = vsyncpa [#allocation3], 0
    %9 = vsyncpa [#allocation5], 0
    loop: start=0, step=1, limit=4
    $region2: #{_lambda_.2} parent=1 // loop_pre_header
      _
    $region3: #{_lambda_.2} parent=1 // loop_header
      %s11 = sphi 0, %s15
      %p12 = scmp.ge.s32.totalorder %s11, 4
      %s21 = sphi 0, %s23
      %s24 = sphi 0, %s21
      %s25 = sphi 0, %s24
      %s41 = sphi 0, %s25
      %s45 = sphi 0, %s45
      %s47 = sphi 0, %s45
      %s48 = sphi 0, %s47
      %s62 = sphi 0, %s48
      %s66 = sphi 0, %s66
      %s68 = sphi 0, %s66
      %s69 = sphi 0, %s68
      %s83 = sphi 0, %s69
      %s89 = sphi 0, %s91
      %s92 = sphi 0, %s89
      %s93 = sphi 0, %s92
      %s109 = sphi 0, %s93
    $region4: #{_lambda_.2} parent=1 // loop_header_branch
      %14 = sbr.rel (%p12) target = $region8
    $region5: #{_lambda_.2} parent=1 // loop_body
      %s16 = ssub.s32 %s11, 1
      %s17 = ssub.s32 %s11, 2
      %s18 = sadd.s32 %s11, 1
      %s19 = ssub.s32 %s11, %s18
      %p20 = scmp.eq.s32.totalorder %s19, 0
      %s22 = sadd.s32 %s21, 1
      %s23 = scalar_select %p20, %s21, %s22
      %p26 = pneg %p20
      %p27 = scmp.eq.s32.totalorder %s11, 1
      %p28 = por %p26, %p27
      %p29 = scmp.ne.s32.totalorder %s21, %s24
      %p30 = scmp.eq.s32.totalorder %s11, 0
      %p31 = por %p29, %p30
      %p32 = scmp.ne.s32.totalorder %s21, %s24
      %p33 = scmp.eq.s32.totalorder %s16, 1
      %p34 = por %p32, %p33
      %p35 = scmp.ne.s32.totalorder %s24, %s25
      %p36 = scmp.eq.s32.totalorder %s16, 0
      %p37 = por %p35, %p36
      %p38 = scmp.ne.s32.totalorder %s24, %s25
      %p39 = scmp.eq.s32.totalorder %s17, 1
      %p40 = por %p38, %p39
      %p42 = scmp.ne.s32.totalorder %s25, %s41
      %p43 = scmp.eq.s32.totalorder %s17, 0
      %p44 = por %p42, %p43
      %s46 = sadd.s32 %s45, 1
      %p49 = scmp.eq.s32.totalorder %s11, 1
      %p50 = scmp.ne.s32.totalorder %s45, %s47
      %p51 = scmp.eq.s32.totalorder %s11, 0
      %p52 = por %p50, %p51
      %p53 = scmp.ne.s32.totalorder %s45, %s47
      %p54 = scmp.eq.s32.totalorder %s16, 1
      %p55 = por %p53, %p54
      %p56 = scmp.ne.s32.totalorder %s47, %s48
      %p57 = scmp.eq.s32.totalorder %s16, 0
      %p58 = por %p56, %p57
      %p59 = scmp.ne.s32.totalorder %s47, %s48
      %p60 = scmp.eq.s32.totalorder %s17, 1
      %p61 = por %p59, %p60
      %p63 = scmp.ne.s32.totalorder %s48, %s62
      %p64 = scmp.eq.s32.totalorder %s17, 0
      %p65 = por %p63, %p64
      %s67 = sadd.s32 %s66, 1
      %p70 = scmp.eq.s32.totalorder %s11, 1
      %p71 = scmp.ne.s32.totalorder %s66, %s68
      %p72 = scmp.eq.s32.totalorder %s11, 0
      %p73 = por %p71, %p72
      %p74 = scmp.ne.s32.totalorder %s66, %s68
      %p75 = scmp.eq.s32.totalorder %s16, 1
      %p76 = por %p74, %p75
      %p77 = scmp.ne.s32.totalorder %s68, %s69
      %p78 = scmp.eq.s32.totalorder %s16, 0
      %p79 = por %p77, %p78
      %p80 = scmp.ne.s32.totalorder %s68, %s69
      %p81 = scmp.eq.s32.totalorder %s17, 1
      %p82 = por %p80, %p81
      %p84 = scmp.ne.s32.totalorder %s69, %s83
      %p85 = scmp.eq.s32.totalorder %s17, 0
      %p86 = por %p84, %p85
      %s87 = ssub.s32 %s11, %s18
      %p88 = scmp.eq.s32.totalorder %s87, 0
      %s90 = sadd.s32 %s89, 1
      %s91 = scalar_select %p88, %s89, %s90
      %p94 = pneg %p88
      %p95 = scmp.eq.s32.totalorder %s11, 1
      %p96 = por %p94, %p95
      %p97 = scmp.ne.s32.totalorder %s89, %s92
      %p98 = scmp.eq.s32.totalorder %s11, 0
      %p99 = por %p97, %p98
      %p100 = scmp.ne.s32.totalorder %s89, %s92
      %p101 = scmp.eq.s32.totalorder %s16, 1
      %p102 = por %p100, %p101
      %p103 = scmp.ne.s32.totalorder %s92, %s93
      %p104 = scmp.eq.s32.totalorder %s16, 0
      %p105 = por %p103, %p104
      %p106 = scmp.ne.s32.totalorder %s92, %s93
      %p107 = scmp.eq.s32.totalorder %s17, 1
      %p108 = por %p106, %p107
      %p110 = scmp.ne.s32.totalorder %s93, %s109
      %p111 = scmp.eq.s32.totalorder %s17, 0
      %p112 = por %p110, %p111
      %p113 = scmp.le.s32.totalorder 1, %s11
      %p114 = scmp.lt.s32.totalorder %s11, 3
      %p115 = pnand %p113, %p114
      %p116 = pneg %p115
      // Predicated region
      $region9: #{_lambda_.2} parent=5 // pred_check
        _
      $region10: #{_lambda_.2} parent=5 // pred_check_branch
        %118 = sbr.rel (%p115) target = $region12
      $region11: #{_lambda_.2} parent=5 // pred_region
        %s119 = ssub.s32 %s11, 1
        // Predicated region
        $region13: #{_lambda_.2} parent=11 // pred_check
          %p120 = pneg %p58
        $region14: #{_lambda_.2} parent=11 // pred_check_branch
          %122 = sbr.rel (%p120) target = $region16
        $region15: #{_lambda_.2} parent=11 // pred_region
          %s124 = ssub.s32 5376, 5376
          %125 = vsyncadd [#allocation3], %s124
          %s126 = sshll.u32 [#allocation2], 4
          %s127 = int_to_ptr.vmem [resolvable:$true] %s126
          %132 = dma.hbm_to_vmem [thread:$0]  %s1, 5376, %s127, [#allocation3], 64, 64, 4
        $region16: #{_lambda_.2} parent=11 // pred_fallthru
          _
        // Predicated region
        $region17: #{_lambda_.2} parent=11 // pred_check
          %p133 = pneg %p79
        $region18: #{_lambda_.2} parent=11 // pred_check_branch
          %135 = sbr.rel (%p133) target = $region20
        $region19: #{_lambda_.2} parent=11 // pred_region
          %s137 = ssub.s32 512, 512
          %138 = vsyncadd [#allocation5], %s137
          %s139 = sshll.u32 [#allocation4], 4
          %s140 = int_to_ptr.vmem [resolvable:$true] %s139
          %145 = dma.hbm_to_vmem [thread:$0]  %s2, 512, %s140, [#allocation5], 128, 128, 8
        $region20: #{_lambda_.2} parent=11 // pred_fallthru
          _
      $region12: #{_lambda_.2} parent=5 // pred_fallthru
        _
      %p146 = scmp.lt.s32.totalorder %s11, 2
      // Predicated region
      $region21: #{_lambda_.2} parent=5 // pred_check
        %p147 = pneg %p146
      $region22: #{_lambda_.2} parent=5 // pred_check_branch
        %149 = sbr.rel (%p147) target = $region24
      $region23: #{_lambda_.2} parent=5 // pred_region
        // Predicated region
        $region25: #{_lambda_.2} parent=23 // pred_check
          %p150 = pneg %p31
        $region26: #{_lambda_.2} parent=23 // pred_check_branch
          %152 = sbr.rel (%p150) target = $region28
        $region27: #{_lambda_.2} parent=23 // pred_region
          %s153 = smul.u32 12, %s11
          %p154 = scmp.lt.s32.totalorder %s153, 23
          %s155 = scalar_select %p154, %s153, 23
          %s156 = smul.addr %s155, 4
          %s157 = scalar_lea.vmem %s0, %s156
          %s158 = smul.u32 12, %s11
        $region28: #{_lambda_.2} parent=23 // pred_fallthru
          _
      $region24: #{_lambda_.2} parent=5 // pred_fallthru
        _
      %p159 = scmp.le.s32.totalorder 1, %s11
      %p160 = scmp.lt.s32.totalorder %s11, 3
      %p161 = pnand %p159, %p160
      %p162 = pneg %p161
      // Predicated region
      $region29: #{_lambda_.2} parent=5 // pred_check
        _
      $region30: #{_lambda_.2} parent=5 // pred_check_branch
        %164 = sbr.rel (%p161) target = $region32
      $region31: #{_lambda_.2} parent=5 // pred_region
        %s165 = ssub.s32 %s11, 1
        // Predicated region
        $region33: #{_lambda_.2} parent=31 // pred_check
          %p166 = pneg %p58
        $region34: #{_lambda_.2} parent=31 // pred_check_branch
          %168 = sbr.rel (%p166) target = $region36
        $region35: #{_lambda_.2} parent=31 // pred_region
          %169 = dma.done [#allocation3], 5376
        $region36: #{_lambda_.2} parent=31 // pred_fallthru
          _
        // Predicated region
        $region37: #{_lambda_.2} parent=31 // pred_check
          %p170 = pneg %p79
        $region38: #{_lambda_.2} parent=31 // pred_check_branch
          %172 = sbr.rel (%p170) target = $region40
        $region39: #{_lambda_.2} parent=31 // pred_region
          %173 = dma.done [#allocation5], 512
        $region40: #{_lambda_.2} parent=31 // pred_fallthru
          _
        %s174 = smul.u32 12, %s16
        %p175 = scmp.lt.s32.totalorder %s174, 23
        %s176 = scalar_select %p175, %s174, 23
        %s177 = smul.addr %s176, 4
        %s178 = scalar_lea.vmem %s0, %s177
        %p179 = pneg %p37
        %p180 = pneg %p34
        %p181 = pneg %p58
        %p182 = pneg %p55
        %p183 = pneg %p79
        %p184 = pneg %p76
        %p185 = pneg %p105
        %p186 = pneg %p102
        %s187 = smul.u32 84, %s16
        %p188 = scmp.lt.s32.totalorder %s187, 167
        %s189 = scalar_select %p188, %s187, 167
        %s190 = smul.addr %s189, 2
        %s191 = smul.addr %s190, 4
        %s192 = scalar_lea.vmem %s3, %s191
        %s193 = smul.u32 12, %s16
        %p194 = scmp.lt.s32.totalorder %s193, 23
        %s195 = scalar_select %p194, %s193, 23
        %s196 = smul.addr %s195, 4
        %s197 = scalar_lea.vmem %s0, %s196
        %s198 = smul.u32 12, %s16
        %s199 = smul.u32 84, %s16
        %p200 = scmp.lt.s32.totalorder %s199, 167
        %s201 = scalar_select %p200, %s199, 167
        %s202 = smul.addr %s201, 2
        %s203 = smul.addr %s202, 4
        %s204 = scalar_lea.vmem %s3, %s203
        %s205 = smul.u32 84, %s16
        %v207 = vld [vmem:[#allocation2] sm:$0xf]
        %v208 = vld [vmem:[#allocation2 + $0x4] sm:$0xf]
        %v209 = vld [vmem:[#allocation2 + $0x8] sm:$0xf]
        %v210 = vld [vmem:[#allocation2 + $0xc] sm:$0xf]
        %v211 = vld [vmem:[#allocation2 + $0x10] sm:$0xf]
        %v212 = vld [vmem:[#allocation2 + $0x14] sm:$0xf]
        %v213 = vld [vmem:[#allocation2 + $0x18] sm:$0xf]
        %v214 = vld [vmem:[#allocation2 + $0x1c] sm:$0xf]
        %v215 = vld [vmem:[#allocation2 + $0x20] sm:$0xf]
        %v216 = vld [vmem:[#allocation2 + $0x24] sm:$0xf]
        %v217 = vld [vmem:[#allocation2 + $0x28] sm:$0xf]
        %v218 = vld [vmem:[#allocation2 + $0x2c] sm:$0xf]
        %v219 = vld [vmem:[#allocation2 + $0x30] sm:$0xf]
        %v220 = vld [vmem:[#allocation2 + $0x34] sm:$0xf]
        %v221 = vld [vmem:[#allocation2 + $0x38] sm:$0xf]
        %v222 = vld [vmem:[#allocation2 + $0x3c] sm:$0xf]
        %v223 = vld [vmem:[#allocation2 + $0x40] sm:$0xf]
        %v224 = vld [vmem:[#allocation2 + $0x44] sm:$0xf]
        %v225 = vld [vmem:[#allocation2 + $0x48] sm:$0xf]
        %v226 = vld [vmem:[#allocation2 + $0x4c] sm:$0xf]
        %v227 = vld [vmem:[#allocation2 + $0x50] sm:$0xf]
        %v228 = vld [vmem:[#allocation2 + $0x54] sm:$0xf]
        %v229 = vld [vmem:[#allocation2 + $0x58] sm:$0xf]
        %v230 = vld [vmem:[#allocation2 + $0x5c] sm:$0xf]
        %v231 = vld [vmem:[#allocation2 + $0x60] sm:$0xf]
        %v232 = vld [vmem:[#allocation2 + $0x64] sm:$0xf]
        %v233 = vld [vmem:[#allocation2 + $0x68] sm:$0xf]
        %v234 = vld [vmem:[#allocation2 + $0x6c] sm:$0xf]
        %v235 = vld [vmem:[#allocation2 + $0x70] sm:$0xf]
        %v236 = vld [vmem:[#allocation2 + $0x74] sm:$0xf]
        %v237 = vld [vmem:[#allocation2 + $0x78] sm:$0xf]
        %v238 = vld [vmem:[#allocation2 + $0x7c] sm:$0xf]
        %v239 = vld [vmem:[#allocation2 + $0x80] sm:$0xf]
        %v240 = vld [vmem:[#allocation2 + $0x84] sm:$0xf]
        %v241 = vld [vmem:[#allocation2 + $0x88] sm:$0xf]
        %v242 = vld [vmem:[#allocation2 + $0x8c] sm:$0xf]
        %v243 = vld [vmem:[#allocation2 + $0x90] sm:$0xf]
        %v244 = vld [vmem:[#allocation2 + $0x94] sm:$0xf]
        %v245 = vld [vmem:[#allocation2 + $0x98] sm:$0xf]
        %v246 = vld [vmem:[#allocation2 + $0x9c] sm:$0xf]
        %v247 = vld [vmem:[#allocation2 + $0xa0] sm:$0xf]
        %v248 = vld [vmem:[#allocation2 + $0xa4] sm:$0xf]
        %v249 = vld [vmem:[#allocation2 + $0xa8] sm:$0xf]
        %v250 = vld [vmem:[#allocation2 + $0xac] sm:$0xf]
        %v251 = vld [vmem:[#allocation2 + $0xb0] sm:$0xf]
        %v252 = vld [vmem:[#allocation2 + $0xb4] sm:$0xf]
        %v253 = vld [vmem:[#allocation2 + $0xb8] sm:$0xf]
        %v254 = vld [vmem:[#allocation2 + $0xbc] sm:$0xf]
        %v255 = vld [vmem:[#allocation2 + $0xc0] sm:$0xf]
        %v256 = vld [vmem:[#allocation2 + $0xc4] sm:$0xf]
        %v257 = vld [vmem:[#allocation2 + $0xc8] sm:$0xf]
        %v258 = vld [vmem:[#allocation2 + $0xcc] sm:$0xf]
        %v259 = vld [vmem:[#allocation2 + $0xd0] sm:$0xf]
        %v260 = vld [vmem:[#allocation2 + $0xd4] sm:$0xf]
        %v261 = vld [vmem:[#allocation2 + $0xd8] sm:$0xf]
        %v262 = vld [vmem:[#allocation2 + $0xdc] sm:$0xf]
        %v263 = vld [vmem:[#allocation2 + $0xe0] sm:$0xf]
        %v264 = vld [vmem:[#allocation2 + $0xe4] sm:$0xf]
        %v265 = vld [vmem:[#allocation2 + $0xe8] sm:$0xf]
        %v266 = vld [vmem:[#allocation2 + $0xec] sm:$0xf]
        %v267 = vld [vmem:[#allocation2 + $0xf0] sm:$0xf]
        %v268 = vld [vmem:[#allocation2 + $0xf4] sm:$0xf]
        %v269 = vld [vmem:[#allocation2 + $0xf8] sm:$0xf]
        %v270 = vld [vmem:[#allocation2 + $0xfc] sm:$0xf]
        %v271 = vld [vmem:[#allocation2 + $0x100] sm:$0xf]
        %v272 = vld [vmem:[#allocation2 + $0x104] sm:$0xf]
        %v273 = vld [vmem:[#allocation2 + $0x108] sm:$0xf]
        %v274 = vld [vmem:[#allocation2 + $0x10c] sm:$0xf]
        %v275 = vld [vmem:[#allocation2 + $0x110] sm:$0xf]
        %v276 = vld [vmem:[#allocation2 + $0x114] sm:$0xf]
        %v277 = vld [vmem:[#allocation2 + $0x118] sm:$0xf]
        %v278 = vld [vmem:[#allocation2 + $0x11c] sm:$0xf]
        %v279 = vld [vmem:[#allocation2 + $0x120] sm:$0xf]
        %v280 = vld [vmem:[#allocation2 + $0x124] sm:$0xf]
        %v281 = vld [vmem:[#allocation2 + $0x128] sm:$0xf]
        %v282 = vld [vmem:[#allocation2 + $0x12c] sm:$0xf]
        %v283 = vld [vmem:[#allocation2 + $0x130] sm:$0xf]
        %v284 = vld [vmem:[#allocation2 + $0x134] sm:$0xf]
        %v285 = vld [vmem:[#allocation2 + $0x138] sm:$0xf]
        %v286 = vld [vmem:[#allocation2 + $0x13c] sm:$0xf]
        %v287 = vld [vmem:[#allocation2 + $0x140] sm:$0xf]
        %v288 = vld [vmem:[#allocation2 + $0x144] sm:$0xf]
        %v289 = vld [vmem:[#allocation2 + $0x148] sm:$0xf]
        %v290 = vld [vmem:[#allocation2 + $0x14c] sm:$0xf]
        %v291 = vld [vmem:[%s197] sm:$0xf]
        %v292 = vld [vmem:[%s197 + $0x4] sm:$0xf]
        %v293 = vld [vmem:[%s197 + $0x8] sm:$0xf]
        %v294 = vld [vmem:[%s197 + $0xc] sm:$0xf]
        %v295 = vld [vmem:[%s197 + $0x10] sm:$0xf]
        %v296 = vld [vmem:[%s197 + $0x14] sm:$0xf]
        %v297 = vld [vmem:[%s197 + $0x18] sm:$0xf]
        %v298 = vld [vmem:[%s197 + $0x1c] sm:$0xf]
        %v299 = vld [vmem:[%s197 + $0x20] sm:$0xf]
        %v300 = vld [vmem:[%s197 + $0x24] sm:$0xf]
        %v301 = vld [vmem:[%s197 + $0x28] sm:$0xf]
        %v302 = vld [vmem:[%s197 + $0x2c] sm:$0xf]
        %v387 = vunpack.c.l.b16 %v207
        %v388 = vunpack.c.l.b16 %v208
        %v389 = vunpack.c.l.b16 %v209
        %v390 = vunpack.c.l.b16 %v210
        %v391 = vunpack.c.l.b16 %v211
        %v392 = vunpack.c.l.b16 %v212
        %v393 = vunpack.c.l.b16 %v213
        %v394 = vunpack.c.l.b16 %v214
        %v395 = vunpack.c.l.b16 %v215
        %v396 = vunpack.c.l.b16 %v216
        %v397 = vunpack.c.l.b16 %v217
        %v398 = vunpack.c.l.b16 %v218
        %v399 = vunpack.c.l.b16 %v219
        %v400 = vunpack.c.l.b16 %v220
        %v401 = vunpack.c.l.b16 %v221
        %v402 = vunpack.c.l.b16 %v222
        %v403 = vunpack.c.l.b16 %v223
        %v404 = vunpack.c.l.b16 %v224
        %v405 = vunpack.c.l.b16 %v225
        %v406 = vunpack.c.l.b16 %v226
        %v407 = vunpack.c.l.b16 %v227
        %v408 = vunpack.c.l.b16 %v228
        %v409 = vunpack.c.l.b16 %v229
        %v410 = vunpack.c.l.b16 %v230
        %v411 = vunpack.c.l.b16 %v231
        %v412 = vunpack.c.l.b16 %v232
        %v413 = vunpack.c.l.b16 %v233
        %v414 = vunpack.c.l.b16 %v234
        %v415 = vunpack.c.l.b16 %v235
        %v416 = vunpack.c.l.b16 %v236
        %v417 = vunpack.c.l.b16 %v237
        %v418 = vunpack.c.l.b16 %v238
        %v419 = vunpack.c.l.b16 %v239
        %v420 = vunpack.c.l.b16 %v240
        %v421 = vunpack.c.l.b16 %v241
        %v422 = vunpack.c.l.b16 %v242
        %v423 = vunpack.c.l.b16 %v243
        %v424 = vunpack.c.l.b16 %v244
        %v425 = vunpack.c.l.b16 %v245
        %v426 = vunpack.c.l.b16 %v246
        %v427 = vunpack.c.l.b16 %v247
        %v428 = vunpack.c.l.b16 %v248
        %v429 = vunpack.c.l.b16 %v249
        %v430 = vunpack.c.l.b16 %v250
        %v431 = vunpack.c.l.b16 %v251
        %v432 = vunpack.c.l.b16 %v252
        %v433 = vunpack.c.l.b16 %v253
        %v434 = vunpack.c.l.b16 %v254
        %v435 = vunpack.c.l.b16 %v255
        %v436 = vunpack.c.l.b16 %v256
        %v437 = vunpack.c.l.b16 %v257
        %v438 = vunpack.c.l.b16 %v258
        %v439 = vunpack.c.l.b16 %v259
        %v440 = vunpack.c.l.b16 %v260
        %v441 = vunpack.c.l.b16 %v261
        %v442 = vunpack.c.l.b16 %v262
        %v443 = vunpack.c.l.b16 %v263
        %v444 = vunpack.c.l.b16 %v264
        %v445 = vunpack.c.l.b16 %v265
        %v446 = vunpack.c.l.b16 %v266
        %v447 = vunpack.c.l.b16 %v267
        %v448 = vunpack.c.l.b16 %v268
        %v449 = vunpack.c.l.b16 %v269
        %v450 = vunpack.c.l.b16 %v270
        %v451 = vunpack.c.l.b16 %v271
        %v452 = vunpack.c.l.b16 %v272
        %v453 = vunpack.c.l.b16 %v273
        %v454 = vunpack.c.l.b16 %v274
        %v455 = vunpack.c.l.b16 %v275
        %v456 = vunpack.c.l.b16 %v276
        %v457 = vunpack.c.l.b16 %v277
        %v458 = vunpack.c.l.b16 %v278
        %v459 = vunpack.c.l.b16 %v279
        %v460 = vunpack.c.l.b16 %v280
        %v461 = vunpack.c.l.b16 %v281
        %v462 = vunpack.c.l.b16 %v282
        %v463 = vunpack.c.l.b16 %v283
        %v464 = vunpack.c.l.b16 %v284
        %v465 = vunpack.c.l.b16 %v285
        %v466 = vunpack.c.l.b16 %v286
        %v467 = vunpack.c.l.b16 %v287
        %v468 = vunpack.c.l.b16 %v288
        %v469 = vunpack.c.l.b16 %v289
        %v470 = vunpack.c.l.b16 %v290
        %v471 = vpack.c.b16 %v388, %v387
        %v472 = vpack.c.b16 %v390, %v389
        %v473 = vpack.c.b16 %v392, %v391
        %v474 = vpack.c.b16 %v394, %v393
        %v475 = vpack.c.b16 %v396, %v395
        %v476 = vpack.c.b16 %v398, %v397
        %v477 = vpack.c.b16 %v400, %v399
        %v478 = vpack.c.b16 %v402, %v401
        %v479 = vpack.c.b16 %v404, %v403
        %v480 = vpack.c.b16 %v406, %v405
        %v481 = vpack.c.b16 %v408, %v407
        %v482 = vpack.c.b16 %v410, %v409
        %v483 = vpack.c.b16 %v412, %v411
        %v484 = vpack.c.b16 %v414, %v413
        %v485 = vpack.c.b16 %v416, %v415
        %v486 = vpack.c.b16 %v418, %v417
        %v487 = vpack.c.b16 %v420, %v419
        %v488 = vpack.c.b16 %v422, %v421
        %v489 = vpack.c.b16 %v424, %v423
        %v490 = vpack.c.b16 %v426, %v425
        %v491 = vpack.c.b16 %v428, %v427
        %v492 = vpack.c.b16 %v430, %v429
        %v493 = vpack.c.b16 %v432, %v431
        %v494 = vpack.c.b16 %v434, %v433
        %v495 = vpack.c.b16 %v436, %v435
        %v496 = vpack.c.b16 %v438, %v437
        %v497 = vpack.c.b16 %v440, %v439
        %v498 = vpack.c.b16 %v442, %v441
        %v499 = vpack.c.b16 %v444, %v443
        %v500 = vpack.c.b16 %v446, %v445
        %v501 = vpack.c.b16 %v448, %v447
        %v502 = vpack.c.b16 %v450, %v449
        %v503 = vpack.c.b16 %v452, %v451
        %v504 = vpack.c.b16 %v454, %v453
        %v505 = vpack.c.b16 %v456, %v455
        %v506 = vpack.c.b16 %v458, %v457
        %v507 = vpack.c.b16 %v460, %v459
        %v508 = vpack.c.b16 %v462, %v461
        %v509 = vpack.c.b16 %v464, %v463
        %v510 = vpack.c.b16 %v466, %v465
        %v511 = vpack.c.b16 %v468, %v467
        %v512 = vpack.c.b16 %v470, %v469
        %v525 = vunpack.c.l.b16 %v291
        %v526 = vunpack.c.l.b16 %v292
        %v527 = vunpack.c.l.b16 %v293
        %v528 = vunpack.c.l.b16 %v294
        %v529 = vunpack.c.l.b16 %v295
        %v530 = vunpack.c.l.b16 %v296
        %v531 = vunpack.c.l.b16 %v297
        %v532 = vunpack.c.l.b16 %v298
        %v533 = vunpack.c.l.b16 %v299
        %v534 = vunpack.c.l.b16 %v300
        %v535 = vunpack.c.l.b16 %v301
        %v536 = vunpack.c.l.b16 %v302
        %v537 = vpack.c.b16 %v526, %v525
        %v538 = vpack.c.b16 %v528, %v527
        %v539 = vpack.c.b16 %v530, %v529
        %v540 = vpack.c.b16 %v532, %v531
        %v541 = vpack.c.b16 %v534, %v533
        %v542 = vpack.c.b16 %v536, %v535
        %vm549 = vcmask 785408
        %v551 = vsel %vm549, %v471, 0
        %v554 = vsel %vm549, %v472, 0
        %v557 = vsel %vm549, %v473, 0
        %v560 = vsel %vm549, %v474, 0
        %v563 = vsel %vm549, %v475, 0
        %v566 = vsel %vm549, %v476, 0
        %v569 = vsel %vm549, %v477, 0
        %v572 = vsel %vm549, %v478, 0
        %v575 = vsel %vm549, %v479, 0
        %v578 = vsel %vm549, %v480, 0
        %v581 = vsel %vm549, %v481, 0
        %v584 = vsel %vm549, %v482, 0
        %v587 = vsel %vm549, %v483, 0
        %v590 = vsel %vm549, %v484, 0
        %v593 = vsel %vm549, %v485, 0
        %v596 = vsel %vm549, %v486, 0
        %v599 = vsel %vm549, %v487, 0
        %v602 = vsel %vm549, %v488, 0
        %v605 = vsel %vm549, %v489, 0
        %v608 = vsel %vm549, %v490, 0
        %v611 = vsel %vm549, %v491, 0
        %v614 = vsel %vm549, %v492, 0
        %v617 = vsel %vm549, %v493, 0
        %v620 = vsel %vm549, %v494, 0
        %v623 = vsel %vm549, %v495, 0
        %v626 = vsel %vm549, %v496, 0
        %v629 = vsel %vm549, %v497, 0
        %v632 = vsel %vm549, %v498, 0
        %v635 = vsel %vm549, %v499, 0
        %v638 = vsel %vm549, %v500, 0
        %v641 = vsel %vm549, %v501, 0
        %v644 = vsel %vm549, %v502, 0
        %v647 = vsel %vm549, %v503, 0
        %v650 = vsel %vm549, %v504, 0
        %v653 = vsel %vm549, %v505, 0
        %v656 = vsel %vm549, %v506, 0
        %v659 = vsel %vm549, %v507, 0
        %v662 = vsel %vm549, %v508, 0
        %v665 = vsel %vm549, %v509, 0
        %v668 = vsel %vm549, %v510, 0
        %v671 = vsel %vm549, %v511, 0
        %v674 = vsel %vm549, %v512, 0
        %676 = vmatprep.subr.bf16.mxu0 0
        %677 = vmatpush1.bf16.msra.mxu0 0
        %678 = vmatprep.subr.bf16.mxu0 0
        %679 = vmatpush1.bf16.msra.mxu0 0
        %680 = vmatprep.subr.bf16.mxu0 0
        %681 = vmatpush1.bf16.msra.mxu0 %v542
        %682 = vmatprep.subr.bf16.mxu0 0
        %683 = vmatpush1.bf16.msra.mxu0 %v541
        %684 = vmatprep.subr.bf16.mxu0 0
        %685 = vmatpush1.bf16.msra.mxu0 %v540
        %686 = vmatprep.subr.bf16.mxu0 0
        %687 = vmatpush1.bf16.msra.mxu0 %v539
        %688 = vmatprep.subr.bf16.mxu0 0
        %689 = vmatpush1.bf16.msra.mxu0 %v538
        %690 = vmatprep.subr.bf16.mxu0 0
        %691 = vmatpush1.bf16.msra.mxu0 %v537
        %692 = vmatprep.subr.bf16.mxu0 0
        %693 = vmatpush2.bf16.msra.mxu0 0
        %694 = vmatprep.subr.bf16.mxu0 0
        %695 = vmatpush2.bf16.msra.mxu0 0
        %696 = vmatprep.subr.bf16.mxu0 0
        %697 = vmatpush2.bf16.msra.mxu0 0
        %698 = vmatprep.subr.bf16.mxu0 0
        %699 = vmatpush2.bf16.msra.mxu0 0
        %700 = vmatprep.subr.bf16.mxu0 0
        %701 = vmatpush2.bf16.msra.mxu0 0
        %702 = vmatprep.subr.bf16.mxu0 0
        %703 = vmatpush2.bf16.msra.mxu0 0
        %704 = vmatprep.subr.bf16.mxu0 0
        %705 = vmatpush2.bf16.msra.mxu0 0
        %706 = vmatprep.subr.bf16.mxu0 0
        %707 = vmatpush2.bf16.msra.mxu0 0
        %708 = vmatprep.mubr.bf16.mxu0 0
        %709 = vmatmul.mubr.bf16.gmra.mxu0 %v551
        %v710 = vpop.f32.mrf.mxu0
        %v711 = vadd.f32 0.0, %v710
        %v712 = vpop.f32.mrf.mxu0
        %v713 = vpop.f32.mrf.mxu0
        %v714 = vadd.f32 0.0, %v713
        %v715 = vpop.f32.mrf.mxu0
        %716 = vmatprep.mubr.bf16.mxu0 0
        %717 = vmatmul.mubr.bf16.gmra.mxu0 %v554
        %v718 = vpop.f32.mrf.mxu0
        %v719 = vadd.f32 0.0, %v718
        %v720 = vpop.f32.mrf.mxu0
        %v721 = vpop.f32.mrf.mxu0
        %v722 = vadd.f32 0.0, %v721
        %v723 = vpop.f32.mrf.mxu0
        %724 = vmatprep.mubr.bf16.mxu0 0
        %725 = vmatmul.mubr.bf16.gmra.mxu0 %v557
        %v726 = vpop.f32.mrf.mxu0
        %v727 = vadd.f32 0.0, %v726
        %v728 = vpop.f32.mrf.mxu0
        %v729 = vpop.f32.mrf.mxu0
        %v730 = vadd.f32 0.0, %v729
        %v731 = vpop.f32.mrf.mxu0
        %732 = vmatprep.mubr.bf16.mxu0 0
        %733 = vmatmul.mubr.bf16.gmra.mxu0 %v560
        %v734 = vpop.f32.mrf.mxu0
        %v735 = vadd.f32 0.0, %v734
        %v736 = vpop.f32.mrf.mxu0
        %v737 = vpop.f32.mrf.mxu0
        %v738 = vadd.f32 0.0, %v737
        %v739 = vpop.f32.mrf.mxu0
        %740 = vmatprep.mubr.bf16.mxu0 0
        %741 = vmatmul.mubr.bf16.gmra.mxu0 %v563
        %v742 = vpop.f32.mrf.mxu0
        %v743 = vadd.f32 0.0, %v742
        %v744 = vpop.f32.mrf.mxu0
        %v745 = vpop.f32.mrf.mxu0
        %v746 = vadd.f32 0.0, %v745
        %v747 = vpop.f32.mrf.mxu0
        %748 = vmatprep.mubr.bf16.mxu0 0
        %749 = vmatmul.mubr.bf16.gmra.mxu0 %v566
        %v750 = vpop.f32.mrf.mxu0
        %v751 = vadd.f32 0.0, %v750
        %v752 = vpop.f32.mrf.mxu0
        %v753 = vpop.f32.mrf.mxu0
        %v754 = vadd.f32 0.0, %v753
        %v755 = vpop.f32.mrf.mxu0
        %756 = vmatprep.mubr.bf16.mxu0 0
        %757 = vmatmul.mubr.bf16.gmra.mxu0 %v569
        %v758 = vpop.f32.mrf.mxu0
        %v759 = vadd.f32 0.0, %v758
        %v760 = vpop.f32.mrf.mxu0
        %v761 = vpop.f32.mrf.mxu0
        %v762 = vadd.f32 0.0, %v761
        %v763 = vpop.f32.mrf.mxu0
        %764 = vmatprep.mubr.bf16.mxu0 0
        %765 = vmatmul.mubr.bf16.gmra.mxu0 %v572
        %v766 = vpop.f32.mrf.mxu0
        %v767 = vadd.f32 0.0, %v766
        %v768 = vpop.f32.mrf.mxu0
        %v769 = vpop.f32.mrf.mxu0
        %v770 = vadd.f32 0.0, %v769
        %v771 = vpop.f32.mrf.mxu0
        %772 = vmatprep.mubr.bf16.mxu0 0
        %773 = vmatmul.mubr.bf16.gmra.mxu0 %v575
        %v774 = vpop.f32.mrf.mxu0
        %v775 = vadd.f32 0.0, %v774
        %v776 = vpop.f32.mrf.mxu0
        %v777 = vpop.f32.mrf.mxu0
        %v778 = vadd.f32 0.0, %v777
        %v779 = vpop.f32.mrf.mxu0
        %780 = vmatprep.mubr.bf16.mxu0 0
        %781 = vmatmul.mubr.bf16.gmra.mxu0 %v578
        %v782 = vpop.f32.mrf.mxu0
        %v783 = vadd.f32 0.0, %v782
        %v784 = vpop.f32.mrf.mxu0
        %v785 = vpop.f32.mrf.mxu0
        %v786 = vadd.f32 0.0, %v785
        %v787 = vpop.f32.mrf.mxu0
        %788 = vmatprep.mubr.bf16.mxu0 0
        %789 = vmatmul.mubr.bf16.gmra.mxu0 %v581
        %v790 = vpop.f32.mrf.mxu0
        %v791 = vadd.f32 0.0, %v790
        %v792 = vpop.f32.mrf.mxu0
        %v793 = vpop.f32.mrf.mxu0
        %v794 = vadd.f32 0.0, %v793
        %v795 = vpop.f32.mrf.mxu0
        %796 = vmatprep.mubr.bf16.mxu0 0
        %797 = vmatmul.mubr.bf16.gmra.mxu0 %v584
        %v798 = vpop.f32.mrf.mxu0
        %v799 = vadd.f32 0.0, %v798
        %v800 = vpop.f32.mrf.mxu0
        %v801 = vpop.f32.mrf.mxu0
        %v802 = vadd.f32 0.0, %v801
        %v803 = vpop.f32.mrf.mxu0
        %804 = vmatprep.mubr.bf16.mxu0 0
        %805 = vmatmul.mubr.bf16.gmra.mxu0 %v587
        %v806 = vpop.f32.mrf.mxu0
        %v807 = vadd.f32 0.0, %v806
        %v808 = vpop.f32.mrf.mxu0
        %v809 = vpop.f32.mrf.mxu0
        %v810 = vadd.f32 0.0, %v809
        %v811 = vpop.f32.mrf.mxu0
        %812 = vmatprep.mubr.bf16.mxu0 0
        %813 = vmatmul.mubr.bf16.gmra.mxu0 %v590
        %v814 = vpop.f32.mrf.mxu0
        %v815 = vadd.f32 0.0, %v814
        %v816 = vpop.f32.mrf.mxu0
        %v817 = vpop.f32.mrf.mxu0
        %v818 = vadd.f32 0.0, %v817
        %v819 = vpop.f32.mrf.mxu0
        %820 = vmatprep.mubr.bf16.mxu0 0
        %821 = vmatmul.mubr.bf16.gmra.mxu0 %v593
        %v822 = vpop.f32.mrf.mxu0
        %v823 = vadd.f32 0.0, %v822
        %v824 = vpop.f32.mrf.mxu0
        %v825 = vpop.f32.mrf.mxu0
        %v826 = vadd.f32 0.0, %v825
        %v827 = vpop.f32.mrf.mxu0
        %828 = vmatprep.mubr.bf16.mxu0 0
        %829 = vmatmul.mubr.bf16.gmra.mxu0 %v596
        %v830 = vpop.f32.mrf.mxu0
        %v831 = vadd.f32 0.0, %v830
        %v832 = vpop.f32.mrf.mxu0
        %v833 = vpop.f32.mrf.mxu0
        %v834 = vadd.f32 0.0, %v833
        %v835 = vpop.f32.mrf.mxu0
        %836 = vmatprep.mubr.bf16.mxu0 0
        %837 = vmatmul.mubr.bf16.gmra.mxu0 %v599
        %v838 = vpop.f32.mrf.mxu0
        %v839 = vadd.f32 0.0, %v838
        %v840 = vpop.f32.mrf.mxu0
        %v841 = vpop.f32.mrf.mxu0
        %v842 = vadd.f32 0.0, %v841
        %v843 = vpop.f32.mrf.mxu0
        %844 = vmatprep.mubr.bf16.mxu0 0
        %845 = vmatmul.mubr.bf16.gmra.mxu0 %v602
        %v846 = vpop.f32.mrf.mxu0
        %v847 = vadd.f32 0.0, %v846
        %v848 = vpop.f32.mrf.mxu0
        %v849 = vpop.f32.mrf.mxu0
        %v850 = vadd.f32 0.0, %v849
        %v851 = vpop.f32.mrf.mxu0
        %852 = vmatprep.mubr.bf16.mxu0 0
        %853 = vmatmul.mubr.bf16.gmra.mxu0 %v605
        %v854 = vpop.f32.mrf.mxu0
        %v855 = vadd.f32 0.0, %v854
        %v856 = vpop.f32.mrf.mxu0
        %v857 = vpop.f32.mrf.mxu0
        %v858 = vadd.f32 0.0, %v857
        %v859 = vpop.f32.mrf.mxu0
        %860 = vmatprep.mubr.bf16.mxu0 0
        %861 = vmatmul.mubr.bf16.gmra.mxu0 %v608
        %v862 = vpop.f32.mrf.mxu0
        %v863 = vadd.f32 0.0, %v862
        %v864 = vpop.f32.mrf.mxu0
        %v865 = vpop.f32.mrf.mxu0
        %v866 = vadd.f32 0.0, %v865
        %v867 = vpop.f32.mrf.mxu0
        %868 = vmatprep.mubr.bf16.mxu0 0
        %869 = vmatmul.mubr.bf16.gmra.mxu0 %v611
        %v870 = vpop.f32.mrf.mxu0
        %v871 = vadd.f32 0.0, %v870
        %v872 = vpop.f32.mrf.mxu0
        %v873 = vpop.f32.mrf.mxu0
        %v874 = vadd.f32 0.0, %v873
        %v875 = vpop.f32.mrf.mxu0
        %876 = vmatprep.mubr.bf16.mxu0 0
        %877 = vmatmul.mubr.bf16.gmra.mxu0 %v614
        %v878 = vpop.f32.mrf.mxu0
        %v879 = vadd.f32 0.0, %v878
        %v880 = vpop.f32.mrf.mxu0
        %v881 = vpop.f32.mrf.mxu0
        %v882 = vadd.f32 0.0, %v881
        %v883 = vpop.f32.mrf.mxu0
        %884 = vmatprep.mubr.bf16.mxu0 0
        %885 = vmatmul.mubr.bf16.gmra.mxu0 %v617
        %v886 = vpop.f32.mrf.mxu0
        %v887 = vadd.f32 0.0, %v886
        %v888 = vpop.f32.mrf.mxu0
        %v889 = vpop.f32.mrf.mxu0
        %v890 = vadd.f32 0.0, %v889
        %v891 = vpop.f32.mrf.mxu0
        %892 = vmatprep.mubr.bf16.mxu0 0
        %893 = vmatmul.mubr.bf16.gmra.mxu0 %v620
        %v894 = vpop.f32.mrf.mxu0
        %v895 = vadd.f32 0.0, %v894
        %v896 = vpop.f32.mrf.mxu0
        %v897 = vpop.f32.mrf.mxu0
        %v898 = vadd.f32 0.0, %v897
        %v899 = vpop.f32.mrf.mxu0
        %900 = vmatprep.mubr.bf16.mxu0 0
        %901 = vmatmul.mubr.bf16.gmra.mxu0 %v623
        %v902 = vpop.f32.mrf.mxu0
        %v903 = vadd.f32 0.0, %v902
        %v904 = vpop.f32.mrf.mxu0
        %v905 = vpop.f32.mrf.mxu0
        %v906 = vadd.f32 0.0, %v905
        %v907 = vpop.f32.mrf.mxu0
        %908 = vmatprep.mubr.bf16.mxu0 0
        %909 = vmatmul.mubr.bf16.gmra.mxu0 %v626
        %v910 = vpop.f32.mrf.mxu0
        %v911 = vadd.f32 0.0, %v910
        %v912 = vpop.f32.mrf.mxu0
        %v913 = vpop.f32.mrf.mxu0
        %v914 = vadd.f32 0.0, %v913
        %v915 = vpop.f32.mrf.mxu0
        %916 = vmatprep.mubr.bf16.mxu0 0
        %917 = vmatmul.mubr.bf16.gmra.mxu0 %v629
        %v918 = vpop.f32.mrf.mxu0
        %v919 = vadd.f32 0.0, %v918
        %v920 = vpop.f32.mrf.mxu0
        %v921 = vpop.f32.mrf.mxu0
        %v922 = vadd.f32 0.0, %v921
        %v923 = vpop.f32.mrf.mxu0
        %924 = vmatprep.mubr.bf16.mxu0 0
        %925 = vmatmul.mubr.bf16.gmra.mxu0 %v632
        %v926 = vpop.f32.mrf.mxu0
        %v927 = vadd.f32 0.0, %v926
        %v928 = vpop.f32.mrf.mxu0
        %v929 = vpop.f32.mrf.mxu0
        %v930 = vadd.f32 0.0, %v929
        %v931 = vpop.f32.mrf.mxu0
        %932 = vmatprep.mubr.bf16.mxu0 0
        %933 = vmatmul.mubr.bf16.gmra.mxu0 %v635
        %v934 = vpop.f32.mrf.mxu0
        %v935 = vadd.f32 0.0, %v934
        %v936 = vpop.f32.mrf.mxu0
        %v937 = vpop.f32.mrf.mxu0
        %v938 = vadd.f32 0.0, %v937
        %v939 = vpop.f32.mrf.mxu0
        %940 = vmatprep.mubr.bf16.mxu0 0
        %941 = vmatmul.mubr.bf16.gmra.mxu0 %v638
        %v942 = vpop.f32.mrf.mxu0
        %v943 = vadd.f32 0.0, %v942
        %v944 = vpop.f32.mrf.mxu0
        %v945 = vpop.f32.mrf.mxu0
        %v946 = vadd.f32 0.0, %v945
        %v947 = vpop.f32.mrf.mxu0
        %948 = vmatprep.mubr.bf16.mxu0 0
        %949 = vmatmul.mubr.bf16.gmra.mxu0 %v641
        %v950 = vpop.f32.mrf.mxu0
        %v951 = vadd.f32 0.0, %v950
        %v952 = vpop.f32.mrf.mxu0
        %v953 = vpop.f32.mrf.mxu0
        %v954 = vadd.f32 0.0, %v953
        %v955 = vpop.f32.mrf.mxu0
        %956 = vmatprep.mubr.bf16.mxu0 0
        %957 = vmatmul.mubr.bf16.gmra.mxu0 %v644
        %v958 = vpop.f32.mrf.mxu0
        %v959 = vadd.f32 0.0, %v958
        %v960 = vpop.f32.mrf.mxu0
        %v961 = vpop.f32.mrf.mxu0
        %v962 = vadd.f32 0.0, %v961
        %v963 = vpop.f32.mrf.mxu0
        %964 = vmatprep.mubr.bf16.mxu0 0
        %965 = vmatmul.mubr.bf16.gmra.mxu0 %v647
        %v966 = vpop.f32.mrf.mxu0
        %v967 = vadd.f32 0.0, %v966
        %v968 = vpop.f32.mrf.mxu0
        %v969 = vpop.f32.mrf.mxu0
        %v970 = vadd.f32 0.0, %v969
        %v971 = vpop.f32.mrf.mxu0
        %972 = vmatprep.mubr.bf16.mxu0 0
        %973 = vmatmul.mubr.bf16.gmra.mxu0 %v650
        %v974 = vpop.f32.mrf.mxu0
        %v975 = vadd.f32 0.0, %v974
        %v976 = vpop.f32.mrf.mxu0
        %v977 = vpop.f32.mrf.mxu0
        %v978 = vadd.f32 0.0, %v977
        %v979 = vpop.f32.mrf.mxu0
        %980 = vmatprep.mubr.bf16.mxu0 0
        %981 = vmatmul.mubr.bf16.gmra.mxu0 %v653
        %v982 = vpop.f32.mrf.mxu0
        %v983 = vadd.f32 0.0, %v982
        %v984 = vpop.f32.mrf.mxu0
        %v985 = vpop.f32.mrf.mxu0
        %v986 = vadd.f32 0.0, %v985
        %v987 = vpop.f32.mrf.mxu0
        %988 = vmatprep.mubr.bf16.mxu0 0
        %989 = vmatmul.mubr.bf16.gmra.mxu0 %v656
        %v990 = vpop.f32.mrf.mxu0
        %v991 = vadd.f32 0.0, %v990
        %v992 = vpop.f32.mrf.mxu0
        %v993 = vpop.f32.mrf.mxu0
        %v994 = vadd.f32 0.0, %v993
        %v995 = vpop.f32.mrf.mxu0
        %996 = vmatprep.mubr.bf16.mxu0 0
        %997 = vmatmul.mubr.bf16.gmra.mxu0 %v659
        %v998 = vpop.f32.mrf.mxu0
        %v999 = vadd.f32 0.0, %v998
        %v1000 = vpop.f32.mrf.mxu0
        %v1001 = vpop.f32.mrf.mxu0
        %v1002 = vadd.f32 0.0, %v1001
        %v1003 = vpop.f32.mrf.mxu0
        %1004 = vmatprep.mubr.bf16.mxu0 0
        %1005 = vmatmul.mubr.bf16.gmra.mxu0 %v662
        %v1006 = vpop.f32.mrf.mxu0
        %v1007 = vadd.f32 0.0, %v1006
        %v1008 = vpop.f32.mrf.mxu0
        %v1009 = vpop.f32.mrf.mxu0
        %v1010 = vadd.f32 0.0, %v1009
        %v1011 = vpop.f32.mrf.mxu0
        %1012 = vmatprep.mubr.bf16.mxu0 0
        %1013 = vmatmul.mubr.bf16.gmra.mxu0 %v665
        %v1014 = vpop.f32.mrf.mxu0
        %v1015 = vadd.f32 0.0, %v1014
        %v1016 = vpop.f32.mrf.mxu0
        %v1017 = vpop.f32.mrf.mxu0
        %v1018 = vadd.f32 0.0, %v1017
        %v1019 = vpop.f32.mrf.mxu0
        %1020 = vmatprep.mubr.bf16.mxu0 0
        %1021 = vmatmul.mubr.bf16.gmra.mxu0 %v668
        %v1022 = vpop.f32.mrf.mxu0
        %v1023 = vadd.f32 0.0, %v1022
        %v1024 = vpop.f32.mrf.mxu0
        %v1025 = vpop.f32.mrf.mxu0
        %v1026 = vadd.f32 0.0, %v1025
        %v1027 = vpop.f32.mrf.mxu0
        %1028 = vmatprep.mubr.bf16.mxu0 0
        %1029 = vmatmul.mubr.bf16.gmra.mxu0 %v671
        %v1030 = vpop.f32.mrf.mxu0
        %v1031 = vadd.f32 0.0, %v1030
        %v1032 = vpop.f32.mrf.mxu0
        %v1033 = vpop.f32.mrf.mxu0
        %v1034 = vadd.f32 0.0, %v1033
        %v1035 = vpop.f32.mrf.mxu0
        %1036 = vmatprep.mubr.bf16.mxu0 0
        %1037 = vmatmul.mubr.bf16.gmra.mxu0 %v674
        %v1038 = vpop.f32.mrf.mxu0
        %v1039 = vadd.f32 0.0, %v1038
        %v1040 = vpop.f32.mrf.mxu0
        %v1041 = vpop.f32.mrf.mxu0
        %v1042 = vadd.f32 0.0, %v1041
        %v1043 = vpop.f32.mrf.mxu0
        %1044 = vdwg.mxu0
        %v1045 = vpack.c.bf16 %v714, %v711
        %v1046 = vpack.c.bf16 %v722, %v719
        %v1047 = vpack.c.bf16 %v730, %v727
        %v1048 = vpack.c.bf16 %v738, %v735
        %v1049 = vpack.c.bf16 %v746, %v743
        %v1050 = vpack.c.bf16 %v754, %v751
        %v1051 = vpack.c.bf16 %v762, %v759
        %v1052 = vpack.c.bf16 %v770, %v767
        %v1053 = vpack.c.bf16 %v778, %v775
        %v1054 = vpack.c.bf16 %v786, %v783
        %v1055 = vpack.c.bf16 %v794, %v791
        %v1056 = vpack.c.bf16 %v802, %v799
        %v1057 = vpack.c.bf16 %v810, %v807
        %v1058 = vpack.c.bf16 %v818, %v815
        %v1059 = vpack.c.bf16 %v826, %v823
        %v1060 = vpack.c.bf16 %v834, %v831
        %v1061 = vpack.c.bf16 %v842, %v839
        %v1062 = vpack.c.bf16 %v850, %v847
        %v1063 = vpack.c.bf16 %v858, %v855
        %v1064 = vpack.c.bf16 %v866, %v863
        %v1065 = vpack.c.bf16 %v874, %v871
        %v1066 = vpack.c.bf16 %v882, %v879
        %v1067 = vpack.c.bf16 %v890, %v887
        %v1068 = vpack.c.bf16 %v898, %v895
        %v1069 = vpack.c.bf16 %v906, %v903
        %v1070 = vpack.c.bf16 %v914, %v911
        %v1071 = vpack.c.bf16 %v922, %v919
        %v1072 = vpack.c.bf16 %v930, %v927
        %v1073 = vpack.c.bf16 %v938, %v935
        %v1074 = vpack.c.bf16 %v946, %v943
        %v1075 = vpack.c.bf16 %v954, %v951
        %v1076 = vpack.c.bf16 %v962, %v959
        %v1077 = vpack.c.bf16 %v970, %v967
        %v1078 = vpack.c.bf16 %v978, %v975
        %v1079 = vpack.c.bf16 %v986, %v983
        %v1080 = vpack.c.bf16 %v994, %v991
        %v1081 = vpack.c.bf16 %v1002, %v999
        %v1082 = vpack.c.bf16 %v1010, %v1007
        %v1083 = vpack.c.bf16 %v1018, %v1015
        %v1084 = vpack.c.bf16 %v1026, %v1023
        %v1085 = vpack.c.bf16 %v1034, %v1031
        %v1086 = vpack.c.bf16 %v1042, %v1039
        %v1087 = vld [vmem:[#allocation4] sm:$0xff]
        %v1088 = vld [vmem:[#allocation4 + $0x8] sm:$0xff]
        %v1089 = vld [vmem:[#allocation4 + $0x10] sm:$0xff]
        %v1090 = vld [vmem:[#allocation4 + $0x18] sm:$0xff]
        %v1095 = vunpack.c.l.b16 %v1087
        %v1096 = vunpack.c.h.b16 %v1087
        %v1097 = vunpack.c.l.b16 %v1088
        %v1098 = vunpack.c.h.b16 %v1088
        %v1099 = vunpack.c.l.b16 %v1089
        %v1100 = vunpack.c.h.b16 %v1089
        %v1101 = vunpack.c.l.b16 %v1090
        %v1102 = vunpack.c.h.b16 %v1090
        %v1103 = vpack.c.b16 %v1097, %v1095
        %v1104 = vpack.c.b16 %v1098, %v1096
        %v1105 = vpack.c.b16 %v1101, %v1099
        %v1106 = vpack.c.b16 %v1102, %v1100
        %vm1111 = vcmask 261120
        %v1113 = vsel %vm1111, %v1045, 0
        %v1116 = vsel %vm1111, %v1046, 0
        %v1119 = vsel %vm1111, %v1047, 0
        %v1122 = vsel %vm1111, %v1048, 0
        %v1125 = vsel %vm1111, %v1049, 0
        %v1128 = vsel %vm1111, %v1050, 0
        %v1131 = vsel %vm1111, %v1051, 0
        %v1134 = vsel %vm1111, %v1052, 0
        %v1137 = vsel %vm1111, %v1053, 0
        %v1140 = vsel %vm1111, %v1054, 0
        %v1143 = vsel %vm1111, %v1055, 0
        %v1146 = vsel %vm1111, %v1056, 0
        %v1149 = vsel %vm1111, %v1057, 0
        %v1152 = vsel %vm1111, %v1058, 0
        %v1155 = vsel %vm1111, %v1059, 0
        %v1158 = vsel %vm1111, %v1060, 0
        %v1161 = vsel %vm1111, %v1061, 0
        %v1164 = vsel %vm1111, %v1062, 0
        %v1167 = vsel %vm1111, %v1063, 0
        %v1170 = vsel %vm1111, %v1064, 0
        %v1173 = vsel %vm1111, %v1065, 0
        %v1176 = vsel %vm1111, %v1066, 0
        %v1179 = vsel %vm1111, %v1067, 0
        %v1182 = vsel %vm1111, %v1068, 0
        %v1185 = vsel %vm1111, %v1069, 0
        %v1188 = vsel %vm1111, %v1070, 0
        %v1191 = vsel %vm1111, %v1071, 0
        %v1194 = vsel %vm1111, %v1072, 0
        %v1197 = vsel %vm1111, %v1073, 0
        %v1200 = vsel %vm1111, %v1074, 0
        %v1203 = vsel %vm1111, %v1075, 0
        %v1206 = vsel %vm1111, %v1076, 0
        %v1209 = vsel %vm1111, %v1077, 0
        %v1212 = vsel %vm1111, %v1078, 0
        %v1215 = vsel %vm1111, %v1079, 0
        %v1218 = vsel %vm1111, %v1080, 0
        %v1221 = vsel %vm1111, %v1081, 0
        %v1224 = vsel %vm1111, %v1082, 0
        %v1227 = vsel %vm1111, %v1083, 0
        %v1230 = vsel %vm1111, %v1084, 0
        %v1233 = vsel %vm1111, %v1085, 0
        %v1236 = vsel %vm1111, %v1086, 0
        %1238 = vmatprep.subr.bf16.mxu0 0
        %1239 = vmatpush1.bf16.msra.mxu0 0
        %1240 = vmatprep.subr.bf16.mxu0 0
        %1241 = vmatpush1.bf16.msra.mxu0 0
        %1242 = vmatprep.subr.bf16.mxu0 0
        %1243 = vmatpush1.bf16.msra.mxu0 0
        %1244 = vmatprep.subr.bf16.mxu0 0
        %1245 = vmatpush1.bf16.msra.mxu0 0
        %1246 = vmatprep.subr.bf16.mxu0 0
        %1247 = vmatpush1.bf16.msra.mxu0 0
        %1248 = vmatprep.subr.bf16.mxu0 0
        %1249 = vmatpush1.bf16.msra.mxu0 0
        %1250 = vmatprep.subr.bf16.mxu0 %v1106
        %1251 = vmatpush1.bf16.msra.mxu0 %v1105
        %1252 = vmatprep.subr.bf16.mxu0 %v1104
        %1253 = vmatpush1.bf16.msra.mxu0 %v1103
        %1254 = vmatprep.subr.bf16.mxu0 0
        %1255 = vmatpush2.bf16.msra.mxu0 0
        %1256 = vmatprep.subr.bf16.mxu0 0
        %1257 = vmatpush2.bf16.msra.mxu0 0
        %1258 = vmatprep.subr.bf16.mxu0 0
        %1259 = vmatpush2.bf16.msra.mxu0 0
        %1260 = vmatprep.subr.bf16.mxu0 0
        %1261 = vmatpush2.bf16.msra.mxu0 0
        %1262 = vmatprep.subr.bf16.mxu0 0
        %1263 = vmatpush2.bf16.msra.mxu0 0
        %1264 = vmatprep.subr.bf16.mxu0 0
        %1265 = vmatpush2.bf16.msra.mxu0 0
        %1266 = vmatprep.subr.bf16.mxu0 0
        %1267 = vmatpush2.bf16.msra.mxu0 0
        %1268 = vmatprep.subr.bf16.mxu0 0
        %1269 = vmatpush2.bf16.msra.mxu0 0
        %1270 = vmatprep.mubr.bf16.mxu0 0
        %1271 = vmatmul.mubr.bf16.gmra.mxu0 %v1113
        %v1272 = vpop.f32.mrf.mxu0
        %v1273 = vadd.f32 0.0, %v1272
        %v1274 = vpop.f32.mrf.mxu0
        %v1275 = vadd.f32 0.0, %v1274
        %v1276 = vpop.f32.mrf.mxu0
        %v1277 = vadd.f32 0.0, %v1276
        %v1278 = vpop.f32.mrf.mxu0
        %v1279 = vadd.f32 0.0, %v1278
        %1280 = vmatprep.mubr.bf16.mxu0 0
        %1281 = vmatmul.mubr.bf16.gmra.mxu0 %v1116
        %v1282 = vpop.f32.mrf.mxu0
        %v1283 = vadd.f32 0.0, %v1282
        %v1284 = vpop.f32.mrf.mxu0
        %v1285 = vadd.f32 0.0, %v1284
        %v1286 = vpop.f32.mrf.mxu0
        %v1287 = vadd.f32 0.0, %v1286
        %v1288 = vpop.f32.mrf.mxu0
        %v1289 = vadd.f32 0.0, %v1288
        %1290 = vmatprep.mubr.bf16.mxu0 0
        %1291 = vmatmul.mubr.bf16.gmra.mxu0 %v1119
        %v1292 = vpop.f32.mrf.mxu0
        %v1293 = vadd.f32 0.0, %v1292
        %v1294 = vpop.f32.mrf.mxu0
        %v1295 = vadd.f32 0.0, %v1294
        %v1296 = vpop.f32.mrf.mxu0
        %v1297 = vadd.f32 0.0, %v1296
        %v1298 = vpop.f32.mrf.mxu0
        %v1299 = vadd.f32 0.0, %v1298
        %1300 = vmatprep.mubr.bf16.mxu0 0
        %1301 = vmatmul.mubr.bf16.gmra.mxu0 %v1122
        %v1302 = vpop.f32.mrf.mxu0
        %v1303 = vadd.f32 0.0, %v1302
        %v1304 = vpop.f32.mrf.mxu0
        %v1305 = vadd.f32 0.0, %v1304
        %v1306 = vpop.f32.mrf.mxu0
        %v1307 = vadd.f32 0.0, %v1306
        %v1308 = vpop.f32.mrf.mxu0
        %v1309 = vadd.f32 0.0, %v1308
        %1310 = vmatprep.mubr.bf16.mxu0 0
        %1311 = vmatmul.mubr.bf16.gmra.mxu0 %v1125
        %v1312 = vpop.f32.mrf.mxu0
        %v1313 = vadd.f32 0.0, %v1312
        %v1314 = vpop.f32.mrf.mxu0
        %v1315 = vadd.f32 0.0, %v1314
        %v1316 = vpop.f32.mrf.mxu0
        %v1317 = vadd.f32 0.0, %v1316
        %v1318 = vpop.f32.mrf.mxu0
        %v1319 = vadd.f32 0.0, %v1318
        %1320 = vmatprep.mubr.bf16.mxu0 0
        %1321 = vmatmul.mubr.bf16.gmra.mxu0 %v1128
        %v1322 = vpop.f32.mrf.mxu0
        %v1323 = vadd.f32 0.0, %v1322
        %v1324 = vpop.f32.mrf.mxu0
        %v1325 = vadd.f32 0.0, %v1324
        %v1326 = vpop.f32.mrf.mxu0
        %v1327 = vadd.f32 0.0, %v1326
        %v1328 = vpop.f32.mrf.mxu0
        %v1329 = vadd.f32 0.0, %v1328
        %1330 = vmatprep.mubr.bf16.mxu0 0
        %1331 = vmatmul.mubr.bf16.gmra.mxu0 %v1131
        %v1332 = vpop.f32.mrf.mxu0
        %v1333 = vadd.f32 0.0, %v1332
        %v1334 = vpop.f32.mrf.mxu0
        %v1335 = vadd.f32 0.0, %v1334
        %v1336 = vpop.f32.mrf.mxu0
        %v1337 = vadd.f32 0.0, %v1336
        %v1338 = vpop.f32.mrf.mxu0
        %v1339 = vadd.f32 0.0, %v1338
        %1340 = vmatprep.mubr.bf16.mxu0 0
        %1341 = vmatmul.mubr.bf16.gmra.mxu0 %v1134
        %v1342 = vpop.f32.mrf.mxu0
        %v1343 = vadd.f32 0.0, %v1342
        %v1344 = vpop.f32.mrf.mxu0
        %v1345 = vadd.f32 0.0, %v1344
        %v1346 = vpop.f32.mrf.mxu0
        %v1347 = vadd.f32 0.0, %v1346
        %v1348 = vpop.f32.mrf.mxu0
        %v1349 = vadd.f32 0.0, %v1348
        %1350 = vmatprep.mubr.bf16.mxu0 0
        %1351 = vmatmul.mubr.bf16.gmra.mxu0 %v1137
        %v1352 = vpop.f32.mrf.mxu0
        %v1353 = vadd.f32 0.0, %v1352
        %v1354 = vpop.f32.mrf.mxu0
        %v1355 = vadd.f32 0.0, %v1354
        %v1356 = vpop.f32.mrf.mxu0
        %v1357 = vadd.f32 0.0, %v1356
        %v1358 = vpop.f32.mrf.mxu0
        %v1359 = vadd.f32 0.0, %v1358
        %1360 = vmatprep.mubr.bf16.mxu0 0
        %1361 = vmatmul.mubr.bf16.gmra.mxu0 %v1140
        %v1362 = vpop.f32.mrf.mxu0
        %v1363 = vadd.f32 0.0, %v1362
        %v1364 = vpop.f32.mrf.mxu0
        %v1365 = vadd.f32 0.0, %v1364
        %v1366 = vpop.f32.mrf.mxu0
        %v1367 = vadd.f32 0.0, %v1366
        %v1368 = vpop.f32.mrf.mxu0
        %v1369 = vadd.f32 0.0, %v1368
        %1370 = vmatprep.mubr.bf16.mxu0 0
        %1371 = vmatmul.mubr.bf16.gmra.mxu0 %v1143
        %v1372 = vpop.f32.mrf.mxu0
        %v1373 = vadd.f32 0.0, %v1372
        %v1374 = vpop.f32.mrf.mxu0
        %v1375 = vadd.f32 0.0, %v1374
        %v1376 = vpop.f32.mrf.mxu0
        %v1377 = vadd.f32 0.0, %v1376
        %v1378 = vpop.f32.mrf.mxu0
        %v1379 = vadd.f32 0.0, %v1378
        %1380 = vmatprep.mubr.bf16.mxu0 0
        %1381 = vmatmul.mubr.bf16.gmra.mxu0 %v1146
        %v1382 = vpop.f32.mrf.mxu0
        %v1383 = vadd.f32 0.0, %v1382
        %v1384 = vpop.f32.mrf.mxu0
        %v1385 = vadd.f32 0.0, %v1384
        %v1386 = vpop.f32.mrf.mxu0
        %v1387 = vadd.f32 0.0, %v1386
        %v1388 = vpop.f32.mrf.mxu0
        %v1389 = vadd.f32 0.0, %v1388
        %1390 = vmatprep.mubr.bf16.mxu0 0
        %1391 = vmatmul.mubr.bf16.gmra.mxu0 %v1149
        %v1392 = vpop.f32.mrf.mxu0
        %v1393 = vadd.f32 0.0, %v1392
        %v1394 = vpop.f32.mrf.mxu0
        %v1395 = vadd.f32 0.0, %v1394
        %v1396 = vpop.f32.mrf.mxu0
        %v1397 = vadd.f32 0.0, %v1396
        %v1398 = vpop.f32.mrf.mxu0
        %v1399 = vadd.f32 0.0, %v1398
        %1400 = vmatprep.mubr.bf16.mxu0 0
        %1401 = vmatmul.mubr.bf16.gmra.mxu0 %v1152
        %v1402 = vpop.f32.mrf.mxu0
        %v1403 = vadd.f32 0.0, %v1402
        %v1404 = vpop.f32.mrf.mxu0
        %v1405 = vadd.f32 0.0, %v1404
        %v1406 = vpop.f32.mrf.mxu0
        %v1407 = vadd.f32 0.0, %v1406
        %v1408 = vpop.f32.mrf.mxu0
        %v1409 = vadd.f32 0.0, %v1408
        %1410 = vmatprep.mubr.bf16.mxu0 0
        %1411 = vmatmul.mubr.bf16.gmra.mxu0 %v1155
        %v1412 = vpop.f32.mrf.mxu0
        %v1413 = vadd.f32 0.0, %v1412
        %v1414 = vpop.f32.mrf.mxu0
        %v1415 = vadd.f32 0.0, %v1414
        %v1416 = vpop.f32.mrf.mxu0
        %v1417 = vadd.f32 0.0, %v1416
        %v1418 = vpop.f32.mrf.mxu0
        %v1419 = vadd.f32 0.0, %v1418
        %1420 = vmatprep.mubr.bf16.mxu0 0
        %1421 = vmatmul.mubr.bf16.gmra.mxu0 %v1158
        %v1422 = vpop.f32.mrf.mxu0
        %v1423 = vadd.f32 0.0, %v1422
        %v1424 = vpop.f32.mrf.mxu0
        %v1425 = vadd.f32 0.0, %v1424
        %v1426 = vpop.f32.mrf.mxu0
        %v1427 = vadd.f32 0.0, %v1426
        %v1428 = vpop.f32.mrf.mxu0
        %v1429 = vadd.f32 0.0, %v1428
        %1430 = vmatprep.mubr.bf16.mxu0 0
        %1431 = vmatmul.mubr.bf16.gmra.mxu0 %v1161
        %v1432 = vpop.f32.mrf.mxu0
        %v1433 = vadd.f32 0.0, %v1432
        %v1434 = vpop.f32.mrf.mxu0
        %v1435 = vadd.f32 0.0, %v1434
        %v1436 = vpop.f32.mrf.mxu0
        %v1437 = vadd.f32 0.0, %v1436
        %v1438 = vpop.f32.mrf.mxu0
        %v1439 = vadd.f32 0.0, %v1438
        %1440 = vmatprep.mubr.bf16.mxu0 0
        %1441 = vmatmul.mubr.bf16.gmra.mxu0 %v1164
        %v1442 = vpop.f32.mrf.mxu0
        %v1443 = vadd.f32 0.0, %v1442
        %v1444 = vpop.f32.mrf.mxu0
        %v1445 = vadd.f32 0.0, %v1444
        %v1446 = vpop.f32.mrf.mxu0
        %v1447 = vadd.f32 0.0, %v1446
        %v1448 = vpop.f32.mrf.mxu0
        %v1449 = vadd.f32 0.0, %v1448
        %1450 = vmatprep.mubr.bf16.mxu0 0
        %1451 = vmatmul.mubr.bf16.gmra.mxu0 %v1167
        %v1452 = vpop.f32.mrf.mxu0
        %v1453 = vadd.f32 0.0, %v1452
        %v1454 = vpop.f32.mrf.mxu0
        %v1455 = vadd.f32 0.0, %v1454
        %v1456 = vpop.f32.mrf.mxu0
        %v1457 = vadd.f32 0.0, %v1456
        %v1458 = vpop.f32.mrf.mxu0
        %v1459 = vadd.f32 0.0, %v1458
        %1460 = vmatprep.mubr.bf16.mxu0 0
        %1461 = vmatmul.mubr.bf16.gmra.mxu0 %v1170
        %v1462 = vpop.f32.mrf.mxu0
        %v1463 = vadd.f32 0.0, %v1462
        %v1464 = vpop.f32.mrf.mxu0
        %v1465 = vadd.f32 0.0, %v1464
        %v1466 = vpop.f32.mrf.mxu0
        %v1467 = vadd.f32 0.0, %v1466
        %v1468 = vpop.f32.mrf.mxu0
        %v1469 = vadd.f32 0.0, %v1468
        %1470 = vmatprep.mubr.bf16.mxu0 0
        %1471 = vmatmul.mubr.bf16.gmra.mxu0 %v1173
        %v1472 = vpop.f32.mrf.mxu0
        %v1473 = vadd.f32 0.0, %v1472
        %v1474 = vpop.f32.mrf.mxu0
        %v1475 = vadd.f32 0.0, %v1474
        %v1476 = vpop.f32.mrf.mxu0
        %v1477 = vadd.f32 0.0, %v1476
        %v1478 = vpop.f32.mrf.mxu0
        %v1479 = vadd.f32 0.0, %v1478
        %1480 = vmatprep.mubr.bf16.mxu0 0
        %1481 = vmatmul.mubr.bf16.gmra.mxu0 %v1176
        %v1482 = vpop.f32.mrf.mxu0
        %v1483 = vadd.f32 0.0, %v1482
        %v1484 = vpop.f32.mrf.mxu0
        %v1485 = vadd.f32 0.0, %v1484
        %v1486 = vpop.f32.mrf.mxu0
        %v1487 = vadd.f32 0.0, %v1486
        %v1488 = vpop.f32.mrf.mxu0
        %v1489 = vadd.f32 0.0, %v1488
        %1490 = vmatprep.mubr.bf16.mxu0 0
        %1491 = vmatmul.mubr.bf16.gmra.mxu0 %v1179
        %v1492 = vpop.f32.mrf.mxu0
        %v1493 = vadd.f32 0.0, %v1492
        %v1494 = vpop.f32.mrf.mxu0
        %v1495 = vadd.f32 0.0, %v1494
        %v1496 = vpop.f32.mrf.mxu0
        %v1497 = vadd.f32 0.0, %v1496
        %v1498 = vpop.f32.mrf.mxu0
        %v1499 = vadd.f32 0.0, %v1498
        %1500 = vmatprep.mubr.bf16.mxu0 0
        %1501 = vmatmul.mubr.bf16.gmra.mxu0 %v1182
        %v1502 = vpop.f32.mrf.mxu0
        %v1503 = vadd.f32 0.0, %v1502
        %v1504 = vpop.f32.mrf.mxu0
        %v1505 = vadd.f32 0.0, %v1504
        %v1506 = vpop.f32.mrf.mxu0
        %v1507 = vadd.f32 0.0, %v1506
        %v1508 = vpop.f32.mrf.mxu0
        %v1509 = vadd.f32 0.0, %v1508
        %1510 = vmatprep.mubr.bf16.mxu0 0
        %1511 = vmatmul.mubr.bf16.gmra.mxu0 %v1185
        %v1512 = vpop.f32.mrf.mxu0
        %v1513 = vadd.f32 0.0, %v1512
        %v1514 = vpop.f32.mrf.mxu0
        %v1515 = vadd.f32 0.0, %v1514
        %v1516 = vpop.f32.mrf.mxu0
        %v1517 = vadd.f32 0.0, %v1516
        %v1518 = vpop.f32.mrf.mxu0
        %v1519 = vadd.f32 0.0, %v1518
        %1520 = vmatprep.mubr.bf16.mxu0 0
        %1521 = vmatmul.mubr.bf16.gmra.mxu0 %v1188
        %v1522 = vpop.f32.mrf.mxu0
        %v1523 = vadd.f32 0.0, %v1522
        %v1524 = vpop.f32.mrf.mxu0
        %v1525 = vadd.f32 0.0, %v1524
        %v1526 = vpop.f32.mrf.mxu0
        %v1527 = vadd.f32 0.0, %v1526
        %v1528 = vpop.f32.mrf.mxu0
        %v1529 = vadd.f32 0.0, %v1528
        %1530 = vmatprep.mubr.bf16.mxu0 0
        %1531 = vmatmul.mubr.bf16.gmra.mxu0 %v1191
        %v1532 = vpop.f32.mrf.mxu0
        %v1533 = vadd.f32 0.0, %v1532
        %v1534 = vpop.f32.mrf.mxu0
        %v1535 = vadd.f32 0.0, %v1534
        %v1536 = vpop.f32.mrf.mxu0
        %v1537 = vadd.f32 0.0, %v1536
        %v1538 = vpop.f32.mrf.mxu0
        %v1539 = vadd.f32 0.0, %v1538
        %1540 = vmatprep.mubr.bf16.mxu0 0
        %1541 = vmatmul.mubr.bf16.gmra.mxu0 %v1194
        %v1542 = vpop.f32.mrf.mxu0
        %v1543 = vadd.f32 0.0, %v1542
        %v1544 = vpop.f32.mrf.mxu0
        %v1545 = vadd.f32 0.0, %v1544
        %v1546 = vpop.f32.mrf.mxu0
        %v1547 = vadd.f32 0.0, %v1546
        %v1548 = vpop.f32.mrf.mxu0
        %v1549 = vadd.f32 0.0, %v1548
        %1550 = vmatprep.mubr.bf16.mxu0 0
        %1551 = vmatmul.mubr.bf16.gmra.mxu0 %v1197
        %v1552 = vpop.f32.mrf.mxu0
        %v1553 = vadd.f32 0.0, %v1552
        %v1554 = vpop.f32.mrf.mxu0
        %v1555 = vadd.f32 0.0, %v1554
        %v1556 = vpop.f32.mrf.mxu0
        %v1557 = vadd.f32 0.0, %v1556
        %v1558 = vpop.f32.mrf.mxu0
        %v1559 = vadd.f32 0.0, %v1558
        %1560 = vmatprep.mubr.bf16.mxu0 0
        %1561 = vmatmul.mubr.bf16.gmra.mxu0 %v1200
        %v1562 = vpop.f32.mrf.mxu0
        %v1563 = vadd.f32 0.0, %v1562
        %v1564 = vpop.f32.mrf.mxu0
        %v1565 = vadd.f32 0.0, %v1564
        %v1566 = vpop.f32.mrf.mxu0
        %v1567 = vadd.f32 0.0, %v1566
        %v1568 = vpop.f32.mrf.mxu0
        %v1569 = vadd.f32 0.0, %v1568
        %1570 = vmatprep.mubr.bf16.mxu0 0
        %1571 = vmatmul.mubr.bf16.gmra.mxu0 %v1203
        %v1572 = vpop.f32.mrf.mxu0
        %v1573 = vadd.f32 0.0, %v1572
        %v1574 = vpop.f32.mrf.mxu0
        %v1575 = vadd.f32 0.0, %v1574
        %v1576 = vpop.f32.mrf.mxu0
        %v1577 = vadd.f32 0.0, %v1576
        %v1578 = vpop.f32.mrf.mxu0
        %v1579 = vadd.f32 0.0, %v1578
        %1580 = vmatprep.mubr.bf16.mxu0 0
        %1581 = vmatmul.mubr.bf16.gmra.mxu0 %v1206
        %v1582 = vpop.f32.mrf.mxu0
        %v1583 = vadd.f32 0.0, %v1582
        %v1584 = vpop.f32.mrf.mxu0
        %v1585 = vadd.f32 0.0, %v1584
        %v1586 = vpop.f32.mrf.mxu0
        %v1587 = vadd.f32 0.0, %v1586
        %v1588 = vpop.f32.mrf.mxu0
        %v1589 = vadd.f32 0.0, %v1588
        %1590 = vmatprep.mubr.bf16.mxu0 0
        %1591 = vmatmul.mubr.bf16.gmra.mxu0 %v1209
        %v1592 = vpop.f32.mrf.mxu0
        %v1593 = vadd.f32 0.0, %v1592
        %v1594 = vpop.f32.mrf.mxu0
        %v1595 = vadd.f32 0.0, %v1594
        %v1596 = vpop.f32.mrf.mxu0
        %v1597 = vadd.f32 0.0, %v1596
        %v1598 = vpop.f32.mrf.mxu0
        %v1599 = vadd.f32 0.0, %v1598
        %1600 = vmatprep.mubr.bf16.mxu0 0
        %1601 = vmatmul.mubr.bf16.gmra.mxu0 %v1212
        %v1602 = vpop.f32.mrf.mxu0
        %v1603 = vadd.f32 0.0, %v1602
        %v1604 = vpop.f32.mrf.mxu0
        %v1605 = vadd.f32 0.0, %v1604
        %v1606 = vpop.f32.mrf.mxu0
        %v1607 = vadd.f32 0.0, %v1606
        %v1608 = vpop.f32.mrf.mxu0
        %v1609 = vadd.f32 0.0, %v1608
        %1610 = vmatprep.mubr.bf16.mxu0 0
        %1611 = vmatmul.mubr.bf16.gmra.mxu0 %v1215
        %v1612 = vpop.f32.mrf.mxu0
        %v1613 = vadd.f32 0.0, %v1612
        %v1614 = vpop.f32.mrf.mxu0
        %v1615 = vadd.f32 0.0, %v1614
        %v1616 = vpop.f32.mrf.mxu0
        %v1617 = vadd.f32 0.0, %v1616
        %v1618 = vpop.f32.mrf.mxu0
        %v1619 = vadd.f32 0.0, %v1618
        %1620 = vmatprep.mubr.bf16.mxu0 0
        %1621 = vmatmul.mubr.bf16.gmra.mxu0 %v1218
        %v1622 = vpop.f32.mrf.mxu0
        %v1623 = vadd.f32 0.0, %v1622
        %v1624 = vpop.f32.mrf.mxu0
        %v1625 = vadd.f32 0.0, %v1624
        %v1626 = vpop.f32.mrf.mxu0
        %v1627 = vadd.f32 0.0, %v1626
        %v1628 = vpop.f32.mrf.mxu0
        %v1629 = vadd.f32 0.0, %v1628
        %1630 = vmatprep.mubr.bf16.mxu0 0
        %1631 = vmatmul.mubr.bf16.gmra.mxu0 %v1221
        %v1632 = vpop.f32.mrf.mxu0
        %v1633 = vadd.f32 0.0, %v1632
        %v1634 = vpop.f32.mrf.mxu0
        %v1635 = vadd.f32 0.0, %v1634
        %v1636 = vpop.f32.mrf.mxu0
        %v1637 = vadd.f32 0.0, %v1636
        %v1638 = vpop.f32.mrf.mxu0
        %v1639 = vadd.f32 0.0, %v1638
        %1640 = vmatprep.mubr.bf16.mxu0 0
        %1641 = vmatmul.mubr.bf16.gmra.mxu0 %v1224
        %v1642 = vpop.f32.mrf.mxu0
        %v1643 = vadd.f32 0.0, %v1642
        %v1644 = vpop.f32.mrf.mxu0
        %v1645 = vadd.f32 0.0, %v1644
        %v1646 = vpop.f32.mrf.mxu0
        %v1647 = vadd.f32 0.0, %v1646
        %v1648 = vpop.f32.mrf.mxu0
        %v1649 = vadd.f32 0.0, %v1648
        %1650 = vmatprep.mubr.bf16.mxu0 0
        %1651 = vmatmul.mubr.bf16.gmra.mxu0 %v1227
        %v1652 = vpop.f32.mrf.mxu0
        %v1653 = vadd.f32 0.0, %v1652
        %v1654 = vpop.f32.mrf.mxu0
        %v1655 = vadd.f32 0.0, %v1654
        %v1656 = vpop.f32.mrf.mxu0
        %v1657 = vadd.f32 0.0, %v1656
        %v1658 = vpop.f32.mrf.mxu0
        %v1659 = vadd.f32 0.0, %v1658
        %1660 = vmatprep.mubr.bf16.mxu0 0
        %1661 = vmatmul.mubr.bf16.gmra.mxu0 %v1230
        %v1662 = vpop.f32.mrf.mxu0
        %v1663 = vadd.f32 0.0, %v1662
        %v1664 = vpop.f32.mrf.mxu0
        %v1665 = vadd.f32 0.0, %v1664
        %v1666 = vpop.f32.mrf.mxu0
        %v1667 = vadd.f32 0.0, %v1666
        %v1668 = vpop.f32.mrf.mxu0
        %v1669 = vadd.f32 0.0, %v1668
        %1670 = vmatprep.mubr.bf16.mxu0 0
        %1671 = vmatmul.mubr.bf16.gmra.mxu0 %v1233
        %v1672 = vpop.f32.mrf.mxu0
        %v1673 = vadd.f32 0.0, %v1672
        %v1674 = vpop.f32.mrf.mxu0
        %v1675 = vadd.f32 0.0, %v1674
        %v1676 = vpop.f32.mrf.mxu0
        %v1677 = vadd.f32 0.0, %v1676
        %v1678 = vpop.f32.mrf.mxu0
        %v1679 = vadd.f32 0.0, %v1678
        %1680 = vmatprep.mubr.bf16.mxu0 0
        %1681 = vmatmul.mubr.bf16.gmra.mxu0 %v1236
        %v1682 = vpop.f32.mrf.mxu0
        %v1683 = vadd.f32 0.0, %v1682
        %v1684 = vpop.f32.mrf.mxu0
        %v1685 = vadd.f32 0.0, %v1684
        %v1686 = vpop.f32.mrf.mxu0
        %v1687 = vadd.f32 0.0, %v1686
        %v1688 = vpop.f32.mrf.mxu0
        %v1689 = vadd.f32 0.0, %v1688
        %1690 = vdwg.mxu0
        %v1691 = vpack.c.bf16 %v1277, %v1273
        %v1692 = vpack.c.bf16 %v1279, %v1275
        %v1693 = vpack.c.bf16 %v1287, %v1283
        %v1694 = vpack.c.bf16 %v1289, %v1285
        %v1695 = vpack.c.bf16 %v1297, %v1293
        %v1696 = vpack.c.bf16 %v1299, %v1295
        %v1697 = vpack.c.bf16 %v1307, %v1303
        %v1698 = vpack.c.bf16 %v1309, %v1305
        %v1699 = vpack.c.bf16 %v1317, %v1313
        %v1700 = vpack.c.bf16 %v1319, %v1315
        %v1701 = vpack.c.bf16 %v1327, %v1323
        %v1702 = vpack.c.bf16 %v1329, %v1325
        %v1703 = vpack.c.bf16 %v1337, %v1333
        %v1704 = vpack.c.bf16 %v1339, %v1335
        %v1705 = vpack.c.bf16 %v1347, %v1343
        %v1706 = vpack.c.bf16 %v1349, %v1345
        %v1707 = vpack.c.bf16 %v1357, %v1353
        %v1708 = vpack.c.bf16 %v1359, %v1355
        %v1709 = vpack.c.bf16 %v1367, %v1363
        %v1710 = vpack.c.bf16 %v1369, %v1365
        %v1711 = vpack.c.bf16 %v1377, %v1373
        %v1712 = vpack.c.bf16 %v1379, %v1375
        %v1713 = vpack.c.bf16 %v1387, %v1383
        %v1714 = vpack.c.bf16 %v1389, %v1385
        %v1715 = vpack.c.bf16 %v1397, %v1393
        %v1716 = vpack.c.bf16 %v1399, %v1395
        %v1717 = vpack.c.bf16 %v1407, %v1403
        %v1718 = vpack.c.bf16 %v1409, %v1405
        %v1719 = vpack.c.bf16 %v1417, %v1413
        %v1720 = vpack.c.bf16 %v1419, %v1415
        %v1721 = vpack.c.bf16 %v1427, %v1423
        %v1722 = vpack.c.bf16 %v1429, %v1425
        %v1723 = vpack.c.bf16 %v1437, %v1433
        %v1724 = vpack.c.bf16 %v1439, %v1435
        %v1725 = vpack.c.bf16 %v1447, %v1443
        %v1726 = vpack.c.bf16 %v1449, %v1445
        %v1727 = vpack.c.bf16 %v1457, %v1453
        %v1728 = vpack.c.bf16 %v1459, %v1455
        %v1729 = vpack.c.bf16 %v1467, %v1463
        %v1730 = vpack.c.bf16 %v1469, %v1465
        %v1731 = vpack.c.bf16 %v1477, %v1473
        %v1732 = vpack.c.bf16 %v1479, %v1475
        %v1733 = vpack.c.bf16 %v1487, %v1483
        %v1734 = vpack.c.bf16 %v1489, %v1485
        %v1735 = vpack.c.bf16 %v1497, %v1493
        %v1736 = vpack.c.bf16 %v1499, %v1495
        %v1737 = vpack.c.bf16 %v1507, %v1503
        %v1738 = vpack.c.bf16 %v1509, %v1505
        %v1739 = vpack.c.bf16 %v1517, %v1513
        %v1740 = vpack.c.bf16 %v1519, %v1515
        %v1741 = vpack.c.bf16 %v1527, %v1523
        %v1742 = vpack.c.bf16 %v1529, %v1525
        %v1743 = vpack.c.bf16 %v1537, %v1533
        %v1744 = vpack.c.bf16 %v1539, %v1535
        %v1745 = vpack.c.bf16 %v1547, %v1543
        %v1746 = vpack.c.bf16 %v1549, %v1545
        %v1747 = vpack.c.bf16 %v1557, %v1553
        %v1748 = vpack.c.bf16 %v1559, %v1555
        %v1749 = vpack.c.bf16 %v1567, %v1563
        %v1750 = vpack.c.bf16 %v1569, %v1565
        %v1751 = vpack.c.bf16 %v1577, %v1573
        %v1752 = vpack.c.bf16 %v1579, %v1575
        %v1753 = vpack.c.bf16 %v1587, %v1583
        %v1754 = vpack.c.bf16 %v1589, %v1585
        %v1755 = vpack.c.bf16 %v1597, %v1593
        %v1756 = vpack.c.bf16 %v1599, %v1595
        %v1757 = vpack.c.bf16 %v1607, %v1603
        %v1758 = vpack.c.bf16 %v1609, %v1605
        %v1759 = vpack.c.bf16 %v1617, %v1613
        %v1760 = vpack.c.bf16 %v1619, %v1615
        %v1761 = vpack.c.bf16 %v1627, %v1623
        %v1762 = vpack.c.bf16 %v1629, %v1625
        %v1763 = vpack.c.bf16 %v1637, %v1633
        %v1764 = vpack.c.bf16 %v1639, %v1635
        %v1765 = vpack.c.bf16 %v1647, %v1643
        %v1766 = vpack.c.bf16 %v1649, %v1645
        %v1767 = vpack.c.bf16 %v1657, %v1653
        %v1768 = vpack.c.bf16 %v1659, %v1655
        %v1769 = vpack.c.bf16 %v1667, %v1663
        %v1770 = vpack.c.bf16 %v1669, %v1665
        %v1771 = vpack.c.bf16 %v1677, %v1673
        %v1772 = vpack.c.bf16 %v1679, %v1675
        %v1773 = vpack.c.bf16 %v1687, %v1683
        %v1774 = vpack.c.bf16 %v1689, %v1685
        %v1859 = vunpack.c.l.b16 %v1691
        %v1860 = vunpack.c.l.b16 %v1692
        %v1861 = vunpack.c.h.b16 %v1691
        %v1862 = vunpack.c.h.b16 %v1692
        %v1863 = vunpack.c.l.b16 %v1693
        %v1864 = vunpack.c.l.b16 %v1694
        %v1865 = vunpack.c.h.b16 %v1693
        %v1866 = vunpack.c.h.b16 %v1694
        %v1867 = vunpack.c.l.b16 %v1695
        %v1868 = vunpack.c.l.b16 %v1696
        %v1869 = vunpack.c.h.b16 %v1695
        %v1870 = vunpack.c.h.b16 %v1696
        %v1871 = vunpack.c.l.b16 %v1697
        %v1872 = vunpack.c.l.b16 %v1698
        %v1873 = vunpack.c.h.b16 %v1697
        %v1874 = vunpack.c.h.b16 %v1698
        %v1875 = vunpack.c.l.b16 %v1699
        %v1876 = vunpack.c.l.b16 %v1700
        %v1877 = vunpack.c.h.b16 %v1699
        %v1878 = vunpack.c.h.b16 %v1700
        %v1879 = vunpack.c.l.b16 %v1701
        %v1880 = vunpack.c.l.b16 %v1702
        %v1881 = vunpack.c.h.b16 %v1701
        %v1882 = vunpack.c.h.b16 %v1702
        %v1883 = vunpack.c.l.b16 %v1703
        %v1884 = vunpack.c.l.b16 %v1704
        %v1885 = vunpack.c.h.b16 %v1703
        %v1886 = vunpack.c.h.b16 %v1704
        %v1887 = vunpack.c.l.b16 %v1705
        %v1888 = vunpack.c.l.b16 %v1706
        %v1889 = vunpack.c.h.b16 %v1705
        %v1890 = vunpack.c.h.b16 %v1706
        %v1891 = vunpack.c.l.b16 %v1707
        %v1892 = vunpack.c.l.b16 %v1708
        %v1893 = vunpack.c.h.b16 %v1707
        %v1894 = vunpack.c.h.b16 %v1708
        %v1895 = vunpack.c.l.b16 %v1709
        %v1896 = vunpack.c.l.b16 %v1710
        %v1897 = vunpack.c.h.b16 %v1709
        %v1898 = vunpack.c.h.b16 %v1710
        %v1899 = vunpack.c.l.b16 %v1711
        %v1900 = vunpack.c.l.b16 %v1712
        %v1901 = vunpack.c.h.b16 %v1711
        %v1902 = vunpack.c.h.b16 %v1712
        %v1903 = vunpack.c.l.b16 %v1713
        %v1904 = vunpack.c.l.b16 %v1714
        %v1905 = vunpack.c.h.b16 %v1713
        %v1906 = vunpack.c.h.b16 %v1714
        %v1907 = vunpack.c.l.b16 %v1715
        %v1908 = vunpack.c.l.b16 %v1716
        %v1909 = vunpack.c.h.b16 %v1715
        %v1910 = vunpack.c.h.b16 %v1716
        %v1911 = vunpack.c.l.b16 %v1717
        %v1912 = vunpack.c.l.b16 %v1718
        %v1913 = vunpack.c.h.b16 %v1717
        %v1914 = vunpack.c.h.b16 %v1718
        %v1915 = vunpack.c.l.b16 %v1719
        %v1916 = vunpack.c.l.b16 %v1720
        %v1917 = vunpack.c.h.b16 %v1719
        %v1918 = vunpack.c.h.b16 %v1720
        %v1919 = vunpack.c.l.b16 %v1721
        %v1920 = vunpack.c.l.b16 %v1722
        %v1921 = vunpack.c.h.b16 %v1721
        %v1922 = vunpack.c.h.b16 %v1722
        %v1923 = vunpack.c.l.b16 %v1723
        %v1924 = vunpack.c.l.b16 %v1724
        %v1925 = vunpack.c.h.b16 %v1723
        %v1926 = vunpack.c.h.b16 %v1724
        %v1927 = vunpack.c.l.b16 %v1725
        %v1928 = vunpack.c.l.b16 %v1726
        %v1929 = vunpack.c.h.b16 %v1725
        %v1930 = vunpack.c.h.b16 %v1726
        %v1931 = vunpack.c.l.b16 %v1727
        %v1932 = vunpack.c.l.b16 %v1728
        %v1933 = vunpack.c.h.b16 %v1727
        %v1934 = vunpack.c.h.b16 %v1728
        %v1935 = vunpack.c.l.b16 %v1729
        %v1936 = vunpack.c.l.b16 %v1730
        %v1937 = vunpack.c.h.b16 %v1729
        %v1938 = vunpack.c.h.b16 %v1730
        %v1939 = vunpack.c.l.b16 %v1731
        %v1940 = vunpack.c.l.b16 %v1732
        %v1941 = vunpack.c.h.b16 %v1731
        %v1942 = vunpack.c.h.b16 %v1732
        %v1943 = vunpack.c.l.b16 %v1733
        %v1944 = vunpack.c.l.b16 %v1734
        %v1945 = vunpack.c.h.b16 %v1733
        %v1946 = vunpack.c.h.b16 %v1734
        %v1947 = vunpack.c.l.b16 %v1735
        %v1948 = vunpack.c.l.b16 %v1736
        %v1949 = vunpack.c.h.b16 %v1735
        %v1950 = vunpack.c.h.b16 %v1736
        %v1951 = vunpack.c.l.b16 %v1737
        %v1952 = vunpack.c.l.b16 %v1738
        %v1953 = vunpack.c.h.b16 %v1737
        %v1954 = vunpack.c.h.b16 %v1738
        %v1955 = vunpack.c.l.b16 %v1739
        %v1956 = vunpack.c.l.b16 %v1740
        %v1957 = vunpack.c.h.b16 %v1739
        %v1958 = vunpack.c.h.b16 %v1740
        %v1959 = vunpack.c.l.b16 %v1741
        %v1960 = vunpack.c.l.b16 %v1742
        %v1961 = vunpack.c.h.b16 %v1741
        %v1962 = vunpack.c.h.b16 %v1742
        %v1963 = vunpack.c.l.b16 %v1743
        %v1964 = vunpack.c.l.b16 %v1744
        %v1965 = vunpack.c.h.b16 %v1743
        %v1966 = vunpack.c.h.b16 %v1744
        %v1967 = vunpack.c.l.b16 %v1745
        %v1968 = vunpack.c.l.b16 %v1746
        %v1969 = vunpack.c.h.b16 %v1745
        %v1970 = vunpack.c.h.b16 %v1746
        %v1971 = vunpack.c.l.b16 %v1747
        %v1972 = vunpack.c.l.b16 %v1748
        %v1973 = vunpack.c.h.b16 %v1747
        %v1974 = vunpack.c.h.b16 %v1748
        %v1975 = vunpack.c.l.b16 %v1749
        %v1976 = vunpack.c.l.b16 %v1750
        %v1977 = vunpack.c.h.b16 %v1749
        %v1978 = vunpack.c.h.b16 %v1750
        %v1979 = vunpack.c.l.b16 %v1751
        %v1980 = vunpack.c.l.b16 %v1752
        %v1981 = vunpack.c.h.b16 %v1751
        %v1982 = vunpack.c.h.b16 %v1752
        %v1983 = vunpack.c.l.b16 %v1753
        %v1984 = vunpack.c.l.b16 %v1754
        %v1985 = vunpack.c.h.b16 %v1753
        %v1986 = vunpack.c.h.b16 %v1754
        %v1987 = vunpack.c.l.b16 %v1755
        %v1988 = vunpack.c.l.b16 %v1756
        %v1989 = vunpack.c.h.b16 %v1755
        %v1990 = vunpack.c.h.b16 %v1756
        %v1991 = vunpack.c.l.b16 %v1757
        %v1992 = vunpack.c.l.b16 %v1758
        %v1993 = vunpack.c.h.b16 %v1757
        %v1994 = vunpack.c.h.b16 %v1758
        %v1995 = vunpack.c.l.b16 %v1759
        %v1996 = vunpack.c.l.b16 %v1760
        %v1997 = vunpack.c.h.b16 %v1759
        %v1998 = vunpack.c.h.b16 %v1760
        %v1999 = vunpack.c.l.b16 %v1761
        %v2000 = vunpack.c.l.b16 %v1762
        %v2001 = vunpack.c.h.b16 %v1761
        %v2002 = vunpack.c.h.b16 %v1762
        %v2003 = vunpack.c.l.b16 %v1763
        %v2004 = vunpack.c.l.b16 %v1764
        %v2005 = vunpack.c.h.b16 %v1763
        %v2006 = vunpack.c.h.b16 %v1764
        %v2007 = vunpack.c.l.b16 %v1765
        %v2008 = vunpack.c.l.b16 %v1766
        %v2009 = vunpack.c.h.b16 %v1765
        %v2010 = vunpack.c.h.b16 %v1766
        %v2011 = vunpack.c.l.b16 %v1767
        %v2012 = vunpack.c.l.b16 %v1768
        %v2013 = vunpack.c.h.b16 %v1767
        %v2014 = vunpack.c.h.b16 %v1768
        %v2015 = vunpack.c.l.b16 %v1769
        %v2016 = vunpack.c.l.b16 %v1770
        %v2017 = vunpack.c.h.b16 %v1769
        %v2018 = vunpack.c.h.b16 %v1770
        %v2019 = vunpack.c.l.b16 %v1771
        %v2020 = vunpack.c.l.b16 %v1772
        %v2021 = vunpack.c.h.b16 %v1771
        %v2022 = vunpack.c.h.b16 %v1772
        %v2023 = vunpack.c.l.b16 %v1773
        %v2024 = vunpack.c.l.b16 %v1774
        %v2025 = vunpack.c.h.b16 %v1773
        %v2026 = vunpack.c.h.b16 %v1774
        %v2027 = vpack.c.b16 %v1860, %v1859
        %v2028 = vpack.c.b16 %v1862, %v1861
        %v2029 = vpack.c.b16 %v1864, %v1863
        %v2030 = vpack.c.b16 %v1866, %v1865
        %v2031 = vpack.c.b16 %v1868, %v1867
        %v2032 = vpack.c.b16 %v1870, %v1869
        %v2033 = vpack.c.b16 %v1872, %v1871
        %v2034 = vpack.c.b16 %v1874, %v1873
        %v2035 = vpack.c.b16 %v1876, %v1875
        %v2036 = vpack.c.b16 %v1878, %v1877
        %v2037 = vpack.c.b16 %v1880, %v1879
        %v2038 = vpack.c.b16 %v1882, %v1881
        %v2039 = vpack.c.b16 %v1884, %v1883
        %v2040 = vpack.c.b16 %v1886, %v1885
        %v2041 = vpack.c.b16 %v1888, %v1887
        %v2042 = vpack.c.b16 %v1890, %v1889
        %v2043 = vpack.c.b16 %v1892, %v1891
        %v2044 = vpack.c.b16 %v1894, %v1893
        %v2045 = vpack.c.b16 %v1896, %v1895
        %v2046 = vpack.c.b16 %v1898, %v1897
        %v2047 = vpack.c.b16 %v1900, %v1899
        %v2048 = vpack.c.b16 %v1902, %v1901
        %v2049 = vpack.c.b16 %v1904, %v1903
        %v2050 = vpack.c.b16 %v1906, %v1905
        %v2051 = vpack.c.b16 %v1908, %v1907
        %v2052 = vpack.c.b16 %v1910, %v1909
        %v2053 = vpack.c.b16 %v1912, %v1911
        %v2054 = vpack.c.b16 %v1914, %v1913
        %v2055 = vpack.c.b16 %v1916, %v1915
        %v2056 = vpack.c.b16 %v1918, %v1917
        %v2057 = vpack.c.b16 %v1920, %v1919
        %v2058 = vpack.c.b16 %v1922, %v1921
        %v2059 = vpack.c.b16 %v1924, %v1923
        %v2060 = vpack.c.b16 %v1926, %v1925
        %v2061 = vpack.c.b16 %v1928, %v1927
        %v2062 = vpack.c.b16 %v1930, %v1929
        %v2063 = vpack.c.b16 %v1932, %v1931
        %v2064 = vpack.c.b16 %v1934, %v1933
        %v2065 = vpack.c.b16 %v1936, %v1935
        %v2066 = vpack.c.b16 %v1938, %v1937
        %v2067 = vpack.c.b16 %v1940, %v1939
        %v2068 = vpack.c.b16 %v1942, %v1941
        %v2069 = vpack.c.b16 %v1944, %v1943
        %v2070 = vpack.c.b16 %v1946, %v1945
        %v2071 = vpack.c.b16 %v1948, %v1947
        %v2072 = vpack.c.b16 %v1950, %v1949
        %v2073 = vpack.c.b16 %v1952, %v1951
        %v2074 = vpack.c.b16 %v1954, %v1953
        %v2075 = vpack.c.b16 %v1956, %v1955
        %v2076 = vpack.c.b16 %v1958, %v1957
        %v2077 = vpack.c.b16 %v1960, %v1959
        %v2078 = vpack.c.b16 %v1962, %v1961
        %v2079 = vpack.c.b16 %v1964, %v1963
        %v2080 = vpack.c.b16 %v1966, %v1965
        %v2081 = vpack.c.b16 %v1968, %v1967
        %v2082 = vpack.c.b16 %v1970, %v1969
        %v2083 = vpack.c.b16 %v1972, %v1971
        %v2084 = vpack.c.b16 %v1974, %v1973
        %v2085 = vpack.c.b16 %v1976, %v1975
        %v2086 = vpack.c.b16 %v1978, %v1977
        %v2087 = vpack.c.b16 %v1980, %v1979
        %v2088 = vpack.c.b16 %v1982, %v1981
        %v2089 = vpack.c.b16 %v1984, %v1983
        %v2090 = vpack.c.b16 %v1986, %v1985
        %v2091 = vpack.c.b16 %v1988, %v1987
        %v2092 = vpack.c.b16 %v1990, %v1989
        %v2093 = vpack.c.b16 %v1992, %v1991
        %v2094 = vpack.c.b16 %v1994, %v1993
        %v2095 = vpack.c.b16 %v1996, %v1995
        %v2096 = vpack.c.b16 %v1998, %v1997
        %v2097 = vpack.c.b16 %v2000, %v1999
        %v2098 = vpack.c.b16 %v2002, %v2001
        %v2099 = vpack.c.b16 %v2004, %v2003
        %v2100 = vpack.c.b16 %v2006, %v2005
        %v2101 = vpack.c.b16 %v2008, %v2007
        %v2102 = vpack.c.b16 %v2010, %v2009
        %v2103 = vpack.c.b16 %v2012, %v2011
        %v2104 = vpack.c.b16 %v2014, %v2013
        %v2105 = vpack.c.b16 %v2016, %v2015
        %v2106 = vpack.c.b16 %v2018, %v2017
        %v2107 = vpack.c.b16 %v2020, %v2019
        %v2108 = vpack.c.b16 %v2022, %v2021
        %v2109 = vpack.c.b16 %v2024, %v2023
        %v2110 = vpack.c.b16 %v2026, %v2025
        %vm2195 = vcmask 1043456
        %vm2196 = vcmask 785412
        %vm2197 = vmor %vm2196, %vm2195
        %2198 = vst.msk [vmem:[%s204] sm:$0xff] %vm2197, %v2027
        %2199 = vst.msk [vmem:[%s204 + $0x8] sm:$0xff] %vm2197, %v2028
        %2200 = vst.msk [vmem:[%s204 + $0x10] sm:$0xff] %vm2197, %v2029
        %2201 = vst.msk [vmem:[%s204 + $0x18] sm:$0xff] %vm2197, %v2030
        %2202 = vst.msk [vmem:[%s204 + $0x20] sm:$0xff] %vm2197, %v2031
        %2203 = vst.msk [vmem:[%s204 + $0x28] sm:$0xff] %vm2197, %v2032
        %2204 = vst.msk [vmem:[%s204 + $0x30] sm:$0xff] %vm2197, %v2033
        %2205 = vst.msk [vmem:[%s204 + $0x38] sm:$0xff] %vm2197, %v2034
        %2206 = vst.msk [vmem:[%s204 + $0x40] sm:$0xff] %vm2197, %v2035
        %2207 = vst.msk [vmem:[%s204 + $0x48] sm:$0xff] %vm2197, %v2036
        %2208 = vst.msk [vmem:[%s204 + $0x50] sm:$0xff] %vm2197, %v2037
        %2209 = vst.msk [vmem:[%s204 + $0x58] sm:$0xff] %vm2197, %v2038
        %2210 = vst.msk [vmem:[%s204 + $0x60] sm:$0xff] %vm2197, %v2039
        %2211 = vst.msk [vmem:[%s204 + $0x68] sm:$0xff] %vm2197, %v2040
        %2212 = vst.msk [vmem:[%s204 + $0x70] sm:$0xff] %vm2197, %v2041
        %2213 = vst.msk [vmem:[%s204 + $0x78] sm:$0xff] %vm2197, %v2042
        %2214 = vst.msk [vmem:[%s204 + $0x80] sm:$0xff] %vm2197, %v2043
        %2215 = vst.msk [vmem:[%s204 + $0x88] sm:$0xff] %vm2197, %v2044
        %2216 = vst.msk [vmem:[%s204 + $0x90] sm:$0xff] %vm2197, %v2045
        %2217 = vst.msk [vmem:[%s204 + $0x98] sm:$0xff] %vm2197, %v2046
        %2218 = vst.msk [vmem:[%s204 + $0xa0] sm:$0xff] %vm2197, %v2047
        %2219 = vst.msk [vmem:[%s204 + $0xa8] sm:$0xff] %vm2197, %v2048
        %2220 = vst.msk [vmem:[%s204 + $0xb0] sm:$0xff] %vm2197, %v2049
        %2221 = vst.msk [vmem:[%s204 + $0xb8] sm:$0xff] %vm2197, %v2050
        %2222 = vst.msk [vmem:[%s204 + $0xc0] sm:$0xff] %vm2197, %v2051
        %2223 = vst.msk [vmem:[%s204 + $0xc8] sm:$0xff] %vm2197, %v2052
        %2224 = vst.msk [vmem:[%s204 + $0xd0] sm:$0xff] %vm2197, %v2053
        %2225 = vst.msk [vmem:[%s204 + $0xd8] sm:$0xff] %vm2197, %v2054
        %2226 = vst.msk [vmem:[%s204 + $0xe0] sm:$0xff] %vm2197, %v2055
        %2227 = vst.msk [vmem:[%s204 + $0xe8] sm:$0xff] %vm2197, %v2056
        %2228 = vst.msk [vmem:[%s204 + $0xf0] sm:$0xff] %vm2197, %v2057
        %2229 = vst.msk [vmem:[%s204 + $0xf8] sm:$0xff] %vm2197, %v2058
        %2230 = vst.msk [vmem:[%s204 + $0x100] sm:$0xff] %vm2197, %v2059
        %2231 = vst.msk [vmem:[%s204 + $0x108] sm:$0xff] %vm2197, %v2060
        %2232 = vst.msk [vmem:[%s204 + $0x110] sm:$0xff] %vm2197, %v2061
        %2233 = vst.msk [vmem:[%s204 + $0x118] sm:$0xff] %vm2197, %v2062
        %2234 = vst.msk [vmem:[%s204 + $0x120] sm:$0xff] %vm2197, %v2063
        %2235 = vst.msk [vmem:[%s204 + $0x128] sm:$0xff] %vm2197, %v2064
        %2236 = vst.msk [vmem:[%s204 + $0x130] sm:$0xff] %vm2197, %v2065
        %2237 = vst.msk [vmem:[%s204 + $0x138] sm:$0xff] %vm2197, %v2066
        %2238 = vst.msk [vmem:[%s204 + $0x140] sm:$0xff] %vm2197, %v2067
        %2239 = vst.msk [vmem:[%s204 + $0x148] sm:$0xff] %vm2197, %v2068
        %2240 = vst.msk [vmem:[%s204 + $0x150] sm:$0xff] %vm2197, %v2069
        %2241 = vst.msk [vmem:[%s204 + $0x158] sm:$0xff] %vm2197, %v2070
        %2242 = vst.msk [vmem:[%s204 + $0x160] sm:$0xff] %vm2197, %v2071
        %2243 = vst.msk [vmem:[%s204 + $0x168] sm:$0xff] %vm2197, %v2072
        %2244 = vst.msk [vmem:[%s204 + $0x170] sm:$0xff] %vm2197, %v2073
        %2245 = vst.msk [vmem:[%s204 + $0x178] sm:$0xff] %vm2197, %v2074
        %2246 = vst.msk [vmem:[%s204 + $0x180] sm:$0xff] %vm2197, %v2075
        %2247 = vst.msk [vmem:[%s204 + $0x188] sm:$0xff] %vm2197, %v2076
        %2248 = vst.msk [vmem:[%s204 + $0x190] sm:$0xff] %vm2197, %v2077
        %2249 = vst.msk [vmem:[%s204 + $0x198] sm:$0xff] %vm2197, %v2078
        %2250 = vst.msk [vmem:[%s204 + $0x1a0] sm:$0xff] %vm2197, %v2079
        %2251 = vst.msk [vmem:[%s204 + $0x1a8] sm:$0xff] %vm2197, %v2080
        %2252 = vst.msk [vmem:[%s204 + $0x1b0] sm:$0xff] %vm2197, %v2081
        %2253 = vst.msk [vmem:[%s204 + $0x1b8] sm:$0xff] %vm2197, %v2082
        %2254 = vst.msk [vmem:[%s204 + $0x1c0] sm:$0xff] %vm2197, %v2083
        %2255 = vst.msk [vmem:[%s204 + $0x1c8] sm:$0xff] %vm2197, %v2084
        %2256 = vst.msk [vmem:[%s204 + $0x1d0] sm:$0xff] %vm2197, %v2085
        %2257 = vst.msk [vmem:[%s204 + $0x1d8] sm:$0xff] %vm2197, %v2086
        %2258 = vst.msk [vmem:[%s204 + $0x1e0] sm:$0xff] %vm2197, %v2087
        %2259 = vst.msk [vmem:[%s204 + $0x1e8] sm:$0xff] %vm2197, %v2088
        %2260 = vst.msk [vmem:[%s204 + $0x1f0] sm:$0xff] %vm2197, %v2089
        %2261 = vst.msk [vmem:[%s204 + $0x1f8] sm:$0xff] %vm2197, %v2090
        %2262 = vst.msk [vmem:[%s204 + $0x200] sm:$0xff] %vm2197, %v2091
        %2263 = vst.msk [vmem:[%s204 + $0x208] sm:$0xff] %vm2197, %v2092
        %2264 = vst.msk [vmem:[%s204 + $0x210] sm:$0xff] %vm2197, %v2093
        %2265 = vst.msk [vmem:[%s204 + $0x218] sm:$0xff] %vm2197, %v2094
        %2266 = vst.msk [vmem:[%s204 + $0x220] sm:$0xff] %vm2197, %v2095
        %2267 = vst.msk [vmem:[%s204 + $0x228] sm:$0xff] %vm2197, %v2096
        %2268 = vst.msk [vmem:[%s204 + $0x230] sm:$0xff] %vm2197, %v2097
        %2269 = vst.msk [vmem:[%s204 + $0x238] sm:$0xff] %vm2197, %v2098
        %2270 = vst.msk [vmem:[%s204 + $0x240] sm:$0xff] %vm2197, %v2099
        %2271 = vst.msk [vmem:[%s204 + $0x248] sm:$0xff] %vm2197, %v2100
        %2272 = vst.msk [vmem:[%s204 + $0x250] sm:$0xff] %vm2197, %v2101
        %2273 = vst.msk [vmem:[%s204 + $0x258] sm:$0xff] %vm2197, %v2102
        %2274 = vst.msk [vmem:[%s204 + $0x260] sm:$0xff] %vm2197, %v2103
        %2275 = vst.msk [vmem:[%s204 + $0x268] sm:$0xff] %vm2197, %v2104
        %2276 = vst.msk [vmem:[%s204 + $0x270] sm:$0xff] %vm2197, %v2105
        %2277 = vst.msk [vmem:[%s204 + $0x278] sm:$0xff] %vm2197, %v2106
        %2278 = vst.msk [vmem:[%s204 + $0x280] sm:$0xff] %vm2197, %v2107
        %2279 = vst.msk [vmem:[%s204 + $0x288] sm:$0xff] %vm2197, %v2108
        %2280 = vst.msk [vmem:[%s204 + $0x290] sm:$0xff] %vm2197, %v2109
        %2281 = vst.msk [vmem:[%s204 + $0x298] sm:$0xff] %vm2197, %v2110
        %s2282 = smul.u32 84, %s16
        %p2283 = scmp.lt.s32.totalorder %s2282, 167
        %s2284 = scalar_select %p2283, %s2282, 167
        %s2285 = smul.addr %s2284, 2
        %s2286 = smul.addr %s2285, 4
        %s2287 = scalar_lea.vmem %s3, %s2286
        // Predicated region
        $region41: #{_lambda_.2} parent=31 // pred_check
          %p2288 = pneg %p102
        $region42: #{_lambda_.2} parent=31 // pred_check_branch
          %2290 = sbr.rel (%p2288) target = $region44
        $region43: #{_lambda_.2} parent=31 // pred_region
          %s2291 = smul.u32 84, %s16
        $region44: #{_lambda_.2} parent=31 // pred_fallthru
          _
      $region32: #{_lambda_.2} parent=5 // pred_fallthru
        _
      %p2292 = scmp.le.s32.totalorder 2, %s11
      // Predicated region
      $region45: #{_lambda_.2} parent=5 // pred_check
        %p2293 = pneg %p2292
      $region46: #{_lambda_.2} parent=5 // pred_check_branch
        %2295 = sbr.rel (%p2293) target = $region48
      $region47: #{_lambda_.2} parent=5 // pred_region
        %s2296 = ssub.s32 %s11, 2
        // Predicated region
        $region49: #{_lambda_.2} parent=47 // pred_check
          %p2297 = pneg %p108
        $region50: #{_lambda_.2} parent=47 // pred_check_branch
          %2299 = sbr.rel (%p2297) target = $region52
        $region51: #{_lambda_.2} parent=47 // pred_region
          %s2300 = smul.u32 84, %s17
          %p2301 = scmp.lt.s32.totalorder %s2300, 167
          %s2302 = scalar_select %p2301, %s2300, 167
          %s2303 = smul.addr %s2302, 2
          %s2304 = smul.addr %s2303, 4
          %s2305 = scalar_lea.vmem %s3, %s2304
        $region52: #{_lambda_.2} parent=47 // pred_fallthru
          _
      $region48: #{_lambda_.2} parent=5 // pred_fallthru
        _
    $region6: #{_lambda_.2} parent=1 // loop_footer
      %s15 = sadd.s32 1, %s11
    $region7: #{_lambda_.2} parent=1 // loop_footer_branch
      %10 = sbr.rel target = $region3
    $region8: #{_lambda_.2} parent=1 // loop_exit
      _
    %2306 = vsyncpa [#allocation3], 1
    %s2307 = scalar_lea.sflag [#allocation3], 1
    %2308 = vsyncpa %s2307, 1
    %2309 = vsyncpa [#allocation5], 1

// kernel: _lambda_.3
$region0: #{_lambda_.3}
  #allocation0 [shape = 'u32[]', space=smem, size = 0x4, offset = 0x4, fixed_abs, tag = 'smem constant byte address 0x4 - core index']
  #allocation1 [shape = 'u32[144,128]{1,0:T(1,128)}', space=vmem, size = 0x12000, scoped, tag = 'internal scratch']
  %s0 = inlined_call_operand.vmem [shape: bf16[2,49,512], index: 0, kind: input, shape index: {}]
  %s1 = inlined_call_operand.vmem [shape: bf16[512,32], index: 1, kind: input, shape index: {}]
  %s2 = inlined_call_operand.vmem [shape: f32[1,32], index: 2, kind: input, shape index: {}]
  %s3 = inlined_call_operand.vmem [shape: bf16[32,10], index: 3, kind: input, shape index: {}]
  %s4 = inlined_call_operand.vmem [shape: f32[1,10], index: 4, kind: input, shape index: {}]
  %s5 = inlined_call_operand.hbm [shape: f32[2,10], index: 5, kind: output, shape index: {}]
  %s6 = sld [smem:[#allocation0]]
  $region30: #{_lambda_.3} parent=0
    _
  %s8 = ssub.s32 1, %s6
  %s9 = scalar_select 0, %s8, %s6
  $region1: #{_lambda_.3} parent=0
    #allocation2 [shape = 'u8[1024]{0}', space=vmem, size = 0x400, scoped, tag = 'output window, operand 0, single buffered']
    #allocation3 [shape = 's32[1]{0}', space=sflag, size = 0x4, scoped, tag = 'scoped memory for _lambda_.3']
    %10 = vsyncpa [#allocation3], 0
    // Predicated region
    $region2: #{_lambda_.3} parent=1 // pred_check
      _
    $region3: #{_lambda_.3} parent=1 // pred_check_branch
      %12 = sbr.rel (0) target = $region5
    $region4: #{_lambda_.3} parent=1 // pred_region
      _
    $region5: #{_lambda_.3} parent=1 // pred_fallthru
      _
    // Predicated region
    $region6: #{_lambda_.3} parent=1 // pred_check
      _
    $region7: #{_lambda_.3} parent=1 // pred_check_branch
      %14 = sbr.rel (0) target = $region9
    $region8: #{_lambda_.3} parent=1 // pred_region
      _
    $region9: #{_lambda_.3} parent=1 // pred_fallthru
      _
    // Predicated region
    $region10: #{_lambda_.3} parent=1 // pred_check
      _
    $region11: #{_lambda_.3} parent=1 // pred_check_branch
      %16 = sbr.rel (0) target = $region13
    $region12: #{_lambda_.3} parent=1 // pred_region
      _
    $region13: #{_lambda_.3} parent=1 // pred_fallthru
      _
    // Predicated region
    $region14: #{_lambda_.3} parent=1 // pred_check
      _
    $region15: #{_lambda_.3} parent=1 // pred_check_branch
      %18 = sbr.rel (0) target = $region17
    $region16: #{_lambda_.3} parent=1 // pred_region
      _
    $region17: #{_lambda_.3} parent=1 // pred_fallthru
      _
    // Predicated region
    $region18: #{_lambda_.3} parent=1 // pred_check
      _
    $region19: #{_lambda_.3} parent=1 // pred_check_branch
      %20 = sbr.rel (0) target = $region21
    $region20: #{_lambda_.3} parent=1 // pred_region
      _
    $region21: #{_lambda_.3} parent=1 // pred_fallthru
      _
    %v22 = vld [vmem:[%s0] sm:$0xff]
    %v23 = vld [vmem:[%s0 + $0x8] sm:$0xff]
    %v24 = vld [vmem:[%s0 + $0x10] sm:$0xff]
    %v25 = vld [vmem:[%s0 + $0x18] sm:$0xff]
    %v26 = vld [vmem:[%s0 + $0x20] sm:$0xff]
    %v27 = vld [vmem:[%s0 + $0x28] sm:$0xff]
    %v28 = vld [vmem:[%s0 + $0x30] sm:$0xff]
    %v29 = vld [vmem:[%s0 + $0x38] sm:$0xff]
    %v30 = vld [vmem:[%s0 + $0x40] sm:$0xff]
    %v31 = vld [vmem:[%s0 + $0x48] sm:$0xff]
    %v32 = vld [vmem:[%s0 + $0x50] sm:$0xff]
    %v33 = vld [vmem:[%s0 + $0x58] sm:$0xff]
    %v34 = vld [vmem:[%s0 + $0x60] sm:$0x11]
    %v35 = vld [vmem:[%s0 + $0x68] sm:$0x11]
    %v36 = vld [vmem:[%s0 + $0x70] sm:$0xff]
    %v37 = vld [vmem:[%s0 + $0x78] sm:$0xff]
    %v38 = vld [vmem:[%s0 + $0x80] sm:$0xff]
    %v39 = vld [vmem:[%s0 + $0x88] sm:$0xff]
    %v40 = vld [vmem:[%s0 + $0x90] sm:$0xff]
    %v41 = vld [vmem:[%s0 + $0x98] sm:$0xff]
    %v42 = vld [vmem:[%s0 + $0xa0] sm:$0xff]
    %v43 = vld [vmem:[%s0 + $0xa8] sm:$0xff]
    %v44 = vld [vmem:[%s0 + $0xb0] sm:$0xff]
    %v45 = vld [vmem:[%s0 + $0xb8] sm:$0xff]
    %v46 = vld [vmem:[%s0 + $0xc0] sm:$0xff]
    %v47 = vld [vmem:[%s0 + $0xc8] sm:$0xff]
    %v48 = vld [vmem:[%s0 + $0xd0] sm:$0x11]
    %v49 = vld [vmem:[%s0 + $0xd8] sm:$0x11]
    %v50 = vunpack.c.l.bf16 %v22
    %v51 = vunpack.c.h.bf16 %v22
    %v52 = vunpack.c.l.bf16 %v23
    %v53 = vunpack.c.h.bf16 %v23
    %v54 = vunpack.c.l.bf16 %v24
    %v55 = vunpack.c.h.bf16 %v24
    %v56 = vunpack.c.l.bf16 %v25
    %v57 = vunpack.c.h.bf16 %v25
    %v58 = vunpack.c.l.bf16 %v26
    %v59 = vunpack.c.h.bf16 %v26
    %v60 = vunpack.c.l.bf16 %v27
    %v61 = vunpack.c.h.bf16 %v27
    %v62 = vunpack.c.l.bf16 %v28
    %v63 = vunpack.c.h.bf16 %v28
    %v64 = vunpack.c.l.bf16 %v29
    %v65 = vunpack.c.h.bf16 %v29
    %v66 = vunpack.c.l.bf16 %v30
    %v67 = vunpack.c.h.bf16 %v30
    %v68 = vunpack.c.l.bf16 %v31
    %v69 = vunpack.c.h.bf16 %v31
    %v70 = vunpack.c.l.bf16 %v32
    %v71 = vunpack.c.h.bf16 %v32
    %v72 = vunpack.c.l.bf16 %v33
    %v73 = vunpack.c.h.bf16 %v33
    %v74 = vunpack.c.l.bf16 %v34
    %v75 = vunpack.c.h.bf16 %v34
    %v76 = vunpack.c.l.bf16 %v35
    %v77 = vunpack.c.h.bf16 %v35
    %v78 = vunpack.c.l.bf16 %v36
    %v79 = vunpack.c.h.bf16 %v36
    %v80 = vunpack.c.l.bf16 %v37
    %v81 = vunpack.c.h.bf16 %v37
    %v82 = vunpack.c.l.bf16 %v38
    %v83 = vunpack.c.h.bf16 %v38
    %v84 = vunpack.c.l.bf16 %v39
    %v85 = vunpack.c.h.bf16 %v39
    %v86 = vunpack.c.l.bf16 %v40
    %v87 = vunpack.c.h.bf16 %v40
    %v88 = vunpack.c.l.bf16 %v41
    %v89 = vunpack.c.h.bf16 %v41
    %v90 = vunpack.c.l.bf16 %v42
    %v91 = vunpack.c.h.bf16 %v42
    %v92 = vunpack.c.l.bf16 %v43
    %v93 = vunpack.c.h.bf16 %v43
    %v94 = vunpack.c.l.bf16 %v44
    %v95 = vunpack.c.h.bf16 %v44
    %v96 = vunpack.c.l.bf16 %v45
    %v97 = vunpack.c.h.bf16 %v45
    %v98 = vunpack.c.l.bf16 %v46
    %v99 = vunpack.c.h.bf16 %v46
    %v100 = vunpack.c.l.bf16 %v47
    %v101 = vunpack.c.h.bf16 %v47
    %v102 = vunpack.c.l.bf16 %v48
    %v103 = vunpack.c.h.bf16 %v48
    %v104 = vunpack.c.l.bf16 %v49
    %v105 = vunpack.c.h.bf16 %v49
    %v106 = vadd.f32 %v50, %v54
    %v107 = vadd.f32 %v106, %v58
    %v108 = vadd.f32 %v107, %v62
    %v109 = vadd.f32 %v108, %v66
    %v110 = vadd.f32 %v109, %v70
    %vm111 = vcmask 1040384
    %v112 = vsel %vm111, %v74, 0.0
    %v113 = vadd.f32 %v110, %v112
    %v114 = vrot.slane %v113, 4
    %v115 = vadd.f32 %v113, %v114
    %v116 = vrot.slane %v115, 2
    %v117 = vadd.f32 %v115, %v116
    %v118 = vrot.slane %v117, 1
    %v119 = vadd.f32 %v117, %v118
    %v120 = vadd.f32 %v51, %v55
    %v121 = vadd.f32 %v120, %v59
    %v122 = vadd.f32 %v121, %v63
    %v123 = vadd.f32 %v122, %v67
    %v124 = vadd.f32 %v123, %v71
    %v125 = vsel %vm111, %v75, 0.0
    %v126 = vadd.f32 %v124, %v125
    %v127 = vrot.slane %v126, 4
    %v128 = vadd.f32 %v126, %v127
    %v129 = vrot.slane %v128, 2
    %v130 = vadd.f32 %v128, %v129
    %v131 = vrot.slane %v130, 1
    %v132 = vadd.f32 %v130, %v131
    %v133 = vadd.f32 %v52, %v56
    %v134 = vadd.f32 %v133, %v60
    %v135 = vadd.f32 %v134, %v64
    %v136 = vadd.f32 %v135, %v68
    %v137 = vadd.f32 %v136, %v72
    %v138 = vsel %vm111, %v76, 0.0
    %v139 = vadd.f32 %v137, %v138
    %v140 = vrot.slane %v139, 4
    %v141 = vadd.f32 %v139, %v140
    %v142 = vrot.slane %v141, 2
    %v143 = vadd.f32 %v141, %v142
    %v144 = vrot.slane %v143, 1
    %v145 = vadd.f32 %v143, %v144
    %v146 = vadd.f32 %v53, %v57
    %v147 = vadd.f32 %v146, %v61
    %v148 = vadd.f32 %v147, %v65
    %v149 = vadd.f32 %v148, %v69
    %v150 = vadd.f32 %v149, %v73
    %v151 = vsel %vm111, %v77, 0.0
    %v152 = vadd.f32 %v150, %v151
    %v153 = vrot.slane %v152, 4
    %v154 = vadd.f32 %v152, %v153
    %v155 = vrot.slane %v154, 2
    %v156 = vadd.f32 %v154, %v155
    %v157 = vrot.slane %v156, 1
    %v158 = vadd.f32 %v156, %v157
    %v159 = vadd.f32 %v78, %v82
    %v160 = vadd.f32 %v159, %v86
    %v161 = vadd.f32 %v160, %v90
    %v162 = vadd.f32 %v161, %v94
    %v163 = vadd.f32 %v162, %v98
    %v164 = vsel %vm111, %v102, 0.0
    %v165 = vadd.f32 %v163, %v164
    %v166 = vrot.slane %v165, 4
    %v167 = vadd.f32 %v165, %v166
    %v168 = vrot.slane %v167, 2
    %v169 = vadd.f32 %v167, %v168
    %v170 = vrot.slane %v169, 1
    %v171 = vadd.f32 %v169, %v170
    %v172 = vadd.f32 %v79, %v83
    %v173 = vadd.f32 %v172, %v87
    %v174 = vadd.f32 %v173, %v91
    %v175 = vadd.f32 %v174, %v95
    %v176 = vadd.f32 %v175, %v99
    %v177 = vsel %vm111, %v103, 0.0
    %v178 = vadd.f32 %v176, %v177
    %v179 = vrot.slane %v178, 4
    %v180 = vadd.f32 %v178, %v179
    %v181 = vrot.slane %v180, 2
    %v182 = vadd.f32 %v180, %v181
    %v183 = vrot.slane %v182, 1
    %v184 = vadd.f32 %v182, %v183
    %v185 = vadd.f32 %v80, %v84
    %v186 = vadd.f32 %v185, %v88
    %v187 = vadd.f32 %v186, %v92
    %v188 = vadd.f32 %v187, %v96
    %v189 = vadd.f32 %v188, %v100
    %v190 = vsel %vm111, %v104, 0.0
    %v191 = vadd.f32 %v189, %v190
    %v192 = vrot.slane %v191, 4
    %v193 = vadd.f32 %v191, %v192
    %v194 = vrot.slane %v193, 2
    %v195 = vadd.f32 %v193, %v194
    %v196 = vrot.slane %v195, 1
    %v197 = vadd.f32 %v195, %v196
    %v198 = vadd.f32 %v81, %v85
    %v199 = vadd.f32 %v198, %v89
    %v200 = vadd.f32 %v199, %v93
    %v201 = vadd.f32 %v200, %v97
    %v202 = vadd.f32 %v201, %v101
    %v203 = vsel %vm111, %v105, 0.0
    %v204 = vadd.f32 %v202, %v203
    %v205 = vrot.slane %v204, 4
    %v206 = vadd.f32 %v204, %v205
    %v207 = vrot.slane %v206, 2
    %v208 = vadd.f32 %v206, %v207
    %v209 = vrot.slane %v208, 1
    %v210 = vadd.f32 %v208, %v209
    %v211 = vpack.c.bf16 %v119, %v119
    %v212 = vpack.c.bf16 %v132, %v132
    %v213 = vpack.c.bf16 %v145, %v145
    %v214 = vpack.c.bf16 %v158, %v158
    %v215 = vpack.c.bf16 %v171, %v171
    %v216 = vpack.c.bf16 %v184, %v184
    %v217 = vpack.c.bf16 %v197, %v197
    %v218 = vpack.c.bf16 %v210, %v210
    %v219 = vld [vmem:[%s1] sm:$0xf]
    %v220 = vld [vmem:[%s1 + $0x4] sm:$0xf]
    %v221 = vld [vmem:[%s1 + $0x8] sm:$0xf]
    %v222 = vld [vmem:[%s1 + $0xc] sm:$0xf]
    %v223 = vld [vmem:[%s1 + $0x10] sm:$0xf]
    %v224 = vld [vmem:[%s1 + $0x14] sm:$0xf]
    %v225 = vld [vmem:[%s1 + $0x18] sm:$0xf]
    %v226 = vld [vmem:[%s1 + $0x1c] sm:$0xf]
    %v227 = vld [vmem:[%s1 + $0x20] sm:$0xf]
    %v228 = vld [vmem:[%s1 + $0x24] sm:$0xf]
    %v229 = vld [vmem:[%s1 + $0x28] sm:$0xf]
    %v230 = vld [vmem:[%s1 + $0x2c] sm:$0xf]
    %v231 = vld [vmem:[%s1 + $0x30] sm:$0xf]
    %v232 = vld [vmem:[%s1 + $0x34] sm:$0xf]
    %v233 = vld [vmem:[%s1 + $0x38] sm:$0xf]
    %v234 = vld [vmem:[%s1 + $0x3c] sm:$0xf]
    %v235 = vld [vmem:[%s1 + $0x40] sm:$0xf]
    %v236 = vld [vmem:[%s1 + $0x44] sm:$0xf]
    %v237 = vld [vmem:[%s1 + $0x48] sm:$0xf]
    %v238 = vld [vmem:[%s1 + $0x4c] sm:$0xf]
    %v239 = vld [vmem:[%s1 + $0x50] sm:$0xf]
    %v240 = vld [vmem:[%s1 + $0x54] sm:$0xf]
    %v241 = vld [vmem:[%s1 + $0x58] sm:$0xf]
    %v242 = vld [vmem:[%s1 + $0x5c] sm:$0xf]
    %v243 = vld [vmem:[%s1 + $0x60] sm:$0xf]
    %v244 = vld [vmem:[%s1 + $0x64] sm:$0xf]
    %v245 = vld [vmem:[%s1 + $0x68] sm:$0xf]
    %v246 = vld [vmem:[%s1 + $0x6c] sm:$0xf]
    %v247 = vld [vmem:[%s1 + $0x70] sm:$0xf]
    %v248 = vld [vmem:[%s1 + $0x74] sm:$0xf]
    %v249 = vld [vmem:[%s1 + $0x78] sm:$0xf]
    %v250 = vld [vmem:[%s1 + $0x7c] sm:$0xf]
    %v251 = vld [vmem:[%s1 + $0x80] sm:$0xf]
    %v252 = vld [vmem:[%s1 + $0x84] sm:$0xf]
    %v253 = vld [vmem:[%s1 + $0x88] sm:$0xf]
    %v254 = vld [vmem:[%s1 + $0x8c] sm:$0xf]
    %v255 = vld [vmem:[%s1 + $0x90] sm:$0xf]
    %v256 = vld [vmem:[%s1 + $0x94] sm:$0xf]
    %v257 = vld [vmem:[%s1 + $0x98] sm:$0xf]
    %v258 = vld [vmem:[%s1 + $0x9c] sm:$0xf]
    %v259 = vld [vmem:[%s1 + $0xa0] sm:$0xf]
    %v260 = vld [vmem:[%s1 + $0xa4] sm:$0xf]
    %v261 = vld [vmem:[%s1 + $0xa8] sm:$0xf]
    %v262 = vld [vmem:[%s1 + $0xac] sm:$0xf]
    %v263 = vld [vmem:[%s1 + $0xb0] sm:$0xf]
    %v264 = vld [vmem:[%s1 + $0xb4] sm:$0xf]
    %v265 = vld [vmem:[%s1 + $0xb8] sm:$0xf]
    %v266 = vld [vmem:[%s1 + $0xbc] sm:$0xf]
    %v267 = vld [vmem:[%s1 + $0xc0] sm:$0xf]
    %v268 = vld [vmem:[%s1 + $0xc4] sm:$0xf]
    %v269 = vld [vmem:[%s1 + $0xc8] sm:$0xf]
    %v270 = vld [vmem:[%s1 + $0xcc] sm:$0xf]
    %v271 = vld [vmem:[%s1 + $0xd0] sm:$0xf]
    %v272 = vld [vmem:[%s1 + $0xd4] sm:$0xf]
    %v273 = vld [vmem:[%s1 + $0xd8] sm:$0xf]
    %v274 = vld [vmem:[%s1 + $0xdc] sm:$0xf]
    %v275 = vld [vmem:[%s1 + $0xe0] sm:$0xf]
    %v276 = vld [vmem:[%s1 + $0xe4] sm:$0xf]
    %v277 = vld [vmem:[%s1 + $0xe8] sm:$0xf]
    %v278 = vld [vmem:[%s1 + $0xec] sm:$0xf]
    %v279 = vld [vmem:[%s1 + $0xf0] sm:$0xf]
    %v280 = vld [vmem:[%s1 + $0xf4] sm:$0xf]
    %v281 = vld [vmem:[%s1 + $0xf8] sm:$0xf]
    %v282 = vld [vmem:[%s1 + $0xfc] sm:$0xf]
    %v283 = vld [vmem:[%s2] sm:$0x1]
    %v285 = vlaneseq
    %v286 = vshrl.u32 %v285, 7
    %v287 = vsub.s32 0, %v286
    %v288 = vrot.slane %v283, %v287
    %v298 = vunpack.c.l.b16 %v211
    %v299 = vunpack.c.l.b16 %v212
    %v300 = vunpack.c.l.b16 %v213
    %v301 = vunpack.c.l.b16 %v214
    %v302 = vunpack.c.l.b16 %v215
    %v303 = vunpack.c.l.b16 %v216
    %v304 = vunpack.c.l.b16 %v217
    %v305 = vunpack.c.l.b16 %v218
    %vm306 = vcmask 1041409
    %v307 = vsel %vm306, %v302, %v298
    %v308 = vsel %vm306, %v303, %v299
    %v309 = vsel %vm306, %v304, %v300
    %v310 = vsel %vm306, %v305, %v301
    %v311 = vpack.c.b16 %v307, %v307
    %v312 = vpack.c.b16 %v308, %v308
    %v313 = vpack.c.b16 %v309, %v309
    %v314 = vpack.c.b16 %v310, %v310
    %v383 = vunpack.c.l.b16 %v219
    %v384 = vunpack.c.l.b16 %v220
    %v385 = vunpack.c.l.b16 %v221
    %v386 = vunpack.c.l.b16 %v222
    %v387 = vunpack.c.l.b16 %v223
    %v388 = vunpack.c.l.b16 %v224
    %v389 = vunpack.c.l.b16 %v225
    %v390 = vunpack.c.l.b16 %v226
    %v391 = vunpack.c.l.b16 %v227
    %v392 = vunpack.c.l.b16 %v228
    %v393 = vunpack.c.l.b16 %v229
    %v394 = vunpack.c.l.b16 %v230
    %v395 = vunpack.c.l.b16 %v231
    %v396 = vunpack.c.l.b16 %v232
    %v397 = vunpack.c.l.b16 %v233
    %v398 = vunpack.c.l.b16 %v234
    %v399 = vunpack.c.l.b16 %v235
    %v400 = vunpack.c.l.b16 %v236
    %v401 = vunpack.c.l.b16 %v237
    %v402 = vunpack.c.l.b16 %v238
    %v403 = vunpack.c.l.b16 %v239
    %v404 = vunpack.c.l.b16 %v240
    %v405 = vunpack.c.l.b16 %v241
    %v406 = vunpack.c.l.b16 %v242
    %v407 = vunpack.c.l.b16 %v243
    %v408 = vunpack.c.l.b16 %v244
    %v409 = vunpack.c.l.b16 %v245
    %v410 = vunpack.c.l.b16 %v246
    %v411 = vunpack.c.l.b16 %v247
    %v412 = vunpack.c.l.b16 %v248
    %v413 = vunpack.c.l.b16 %v249
    %v414 = vunpack.c.l.b16 %v250
    %v415 = vunpack.c.l.b16 %v251
    %v416 = vunpack.c.l.b16 %v252
    %v417 = vunpack.c.l.b16 %v253
    %v418 = vunpack.c.l.b16 %v254
    %v419 = vunpack.c.l.b16 %v255
    %v420 = vunpack.c.l.b16 %v256
    %v421 = vunpack.c.l.b16 %v257
    %v422 = vunpack.c.l.b16 %v258
    %v423 = vunpack.c.l.b16 %v259
    %v424 = vunpack.c.l.b16 %v260
    %v425 = vunpack.c.l.b16 %v261
    %v426 = vunpack.c.l.b16 %v262
    %v427 = vunpack.c.l.b16 %v263
    %v428 = vunpack.c.l.b16 %v264
    %v429 = vunpack.c.l.b16 %v265
    %v430 = vunpack.c.l.b16 %v266
    %v431 = vunpack.c.l.b16 %v267
    %v432 = vunpack.c.l.b16 %v268
    %v433 = vunpack.c.l.b16 %v269
    %v434 = vunpack.c.l.b16 %v270
    %v435 = vunpack.c.l.b16 %v271
    %v436 = vunpack.c.l.b16 %v272
    %v437 = vunpack.c.l.b16 %v273
    %v438 = vunpack.c.l.b16 %v274
    %v439 = vunpack.c.l.b16 %v275
    %v440 = vunpack.c.l.b16 %v276
    %v441 = vunpack.c.l.b16 %v277
    %v442 = vunpack.c.l.b16 %v278
    %v443 = vunpack.c.l.b16 %v279
    %v444 = vunpack.c.l.b16 %v280
    %v445 = vunpack.c.l.b16 %v281
    %v446 = vunpack.c.l.b16 %v282
    %v447 = vpack.c.b16 %v384, %v383
    %v448 = vpack.c.b16 %v386, %v385
    %v449 = vpack.c.b16 %v388, %v387
    %v450 = vpack.c.b16 %v390, %v389
    %v451 = vpack.c.b16 %v392, %v391
    %v452 = vpack.c.b16 %v394, %v393
    %v453 = vpack.c.b16 %v396, %v395
    %v454 = vpack.c.b16 %v398, %v397
    %v455 = vpack.c.b16 %v400, %v399
    %v456 = vpack.c.b16 %v402, %v401
    %v457 = vpack.c.b16 %v404, %v403
    %v458 = vpack.c.b16 %v406, %v405
    %v459 = vpack.c.b16 %v408, %v407
    %v460 = vpack.c.b16 %v410, %v409
    %v461 = vpack.c.b16 %v412, %v411
    %v462 = vpack.c.b16 %v414, %v413
    %v463 = vpack.c.b16 %v416, %v415
    %v464 = vpack.c.b16 %v418, %v417
    %v465 = vpack.c.b16 %v420, %v419
    %v466 = vpack.c.b16 %v422, %v421
    %v467 = vpack.c.b16 %v424, %v423
    %v468 = vpack.c.b16 %v426, %v425
    %v469 = vpack.c.b16 %v428, %v427
    %v470 = vpack.c.b16 %v430, %v429
    %v471 = vpack.c.b16 %v432, %v431
    %v472 = vpack.c.b16 %v434, %v433
    %v473 = vpack.c.b16 %v436, %v435
    %v474 = vpack.c.b16 %v438, %v437
    %v475 = vpack.c.b16 %v440, %v439
    %v476 = vpack.c.b16 %v442, %v441
    %v477 = vpack.c.b16 %v444, %v443
    %v478 = vpack.c.b16 %v446, %v445
    %511 = vmatprep.subr.bf16.mxu0 0
    %512 = vmatpush1.bf16.msra.mxu0 %v454
    %513 = vmatprep.subr.bf16.mxu0 0
    %514 = vmatpush1.bf16.msra.mxu0 %v453
    %515 = vmatprep.subr.bf16.mxu0 0
    %516 = vmatpush1.bf16.msra.mxu0 %v452
    %517 = vmatprep.subr.bf16.mxu0 0
    %518 = vmatpush1.bf16.msra.mxu0 %v451
    %519 = vmatprep.subr.bf16.mxu0 0
    %520 = vmatpush1.bf16.msra.mxu0 %v450
    %521 = vmatprep.subr.bf16.mxu0 0
    %522 = vmatpush1.bf16.msra.mxu0 %v449
    %523 = vmatprep.subr.bf16.mxu0 0
    %524 = vmatpush1.bf16.msra.mxu0 %v448
    %525 = vmatprep.subr.bf16.mxu0 0
    %526 = vmatpush1.bf16.msra.mxu0 %v447
    %527 = vmatprep.subr.bf16.mxu0 0
    %528 = vmatpush2.bf16.msra.mxu0 %v462
    %529 = vmatprep.subr.bf16.mxu0 0
    %530 = vmatpush2.bf16.msra.mxu0 %v461
    %531 = vmatprep.subr.bf16.mxu0 0
    %532 = vmatpush2.bf16.msra.mxu0 %v460
    %533 = vmatprep.subr.bf16.mxu0 0
    %534 = vmatpush2.bf16.msra.mxu0 %v459
    %535 = vmatprep.subr.bf16.mxu0 0
    %536 = vmatpush2.bf16.msra.mxu0 %v458
    %537 = vmatprep.subr.bf16.mxu0 0
    %538 = vmatpush2.bf16.msra.mxu0 %v457
    %539 = vmatprep.subr.bf16.mxu0 0
    %540 = vmatpush2.bf16.msra.mxu0 %v456
    %541 = vmatprep.subr.bf16.mxu0 0
    %542 = vmatpush2.bf16.msra.mxu0 %v455
    %543 = vmatprep.mubr.bf16.mxu0 %v312
    %544 = vmatmul.mubr.bf16.gmra.mxu0 %v311
    %v545 = vpop.f32.mrf.mxu0
    %v546 = vadd.f32 %v288, %v545
    %v547 = vpop.f32.mrf.mxu0
    %v548 = vpop.f32.mrf.mxu0
    %v549 = vpop.f32.mrf.mxu0
    %550 = vdwg.mxu0
    %551 = vmatprep.subr.bf16.mxu0 0
    %552 = vmatpush1.bf16.msra.mxu0 %v470
    %553 = vmatprep.subr.bf16.mxu0 0
    %554 = vmatpush1.bf16.msra.mxu0 %v469
    %555 = vmatprep.subr.bf16.mxu0 0
    %556 = vmatpush1.bf16.msra.mxu0 %v468
    %557 = vmatprep.subr.bf16.mxu0 0
    %558 = vmatpush1.bf16.msra.mxu0 %v467
    %559 = vmatprep.subr.bf16.mxu0 0
    %560 = vmatpush1.bf16.msra.mxu0 %v466
    %561 = vmatprep.subr.bf16.mxu0 0
    %562 = vmatpush1.bf16.msra.mxu0 %v465
    %563 = vmatprep.subr.bf16.mxu0 0
    %564 = vmatpush1.bf16.msra.mxu0 %v464
    %565 = vmatprep.subr.bf16.mxu0 0
    %566 = vmatpush1.bf16.msra.mxu0 %v463
    %567 = vmatprep.subr.bf16.mxu0 0
    %568 = vmatpush2.bf16.msra.mxu0 %v478
    %569 = vmatprep.subr.bf16.mxu0 0
    %570 = vmatpush2.bf16.msra.mxu0 %v477
    %571 = vmatprep.subr.bf16.mxu0 0
    %572 = vmatpush2.bf16.msra.mxu0 %v476
    %573 = vmatprep.subr.bf16.mxu0 0
    %574 = vmatpush2.bf16.msra.mxu0 %v475
    %575 = vmatprep.subr.bf16.mxu0 0
    %576 = vmatpush2.bf16.msra.mxu0 %v474
    %577 = vmatprep.subr.bf16.mxu0 0
    %578 = vmatpush2.bf16.msra.mxu0 %v473
    %579 = vmatprep.subr.bf16.mxu0 0
    %580 = vmatpush2.bf16.msra.mxu0 %v472
    %581 = vmatprep.subr.bf16.mxu0 0
    %582 = vmatpush2.bf16.msra.mxu0 %v471
    %583 = vmatprep.mubr.bf16.mxu0 %v314
    %584 = vmatmul.mubr.bf16.gmra.mxu0 %v313
    %v585 = vpop.f32.mrf.mxu0
    %v586 = vadd.f32 %v546, %v585
    %v587 = vpop.f32.mrf.mxu0
    %v588 = vpop.f32.mrf.mxu0
    %v589 = vpop.f32.mrf.mxu0
    %590 = vdwg.mxu0
    %v591 = vmax.f32 %v586, 0.0
    %v592 = vpack.c.bf16 %v591, %v591
    %v593 = vld [vmem:[%s3] sm:$0xf]
    %v594 = vld [vmem:[%s3 + $0x4] sm:$0xf]
    %v595 = vld [vmem:[%s3 + $0x8] sm:$0xf]
    %v596 = vld [vmem:[%s3 + $0xc] sm:$0xf]
    %v597 = vld [vmem:[%s4] sm:$0x1]
    %v599 = vlaneseq
    %v600 = vshrl.u32 %v599, 7
    %v601 = vsub.s32 0, %v600
    %v602 = vrot.slane %v597, %v601
    %v608 = vunpack.c.l.b16 %v593
    %v609 = vunpack.c.l.b16 %v594
    %v610 = vunpack.c.l.b16 %v595
    %v611 = vunpack.c.l.b16 %v596
    %v612 = vpack.c.b16 %v609, %v608
    %v613 = vpack.c.b16 %v611, %v610
    %vm616 = vcmask 261120
    %v618 = vsel %vm616, %v592, 0
    %620 = vmatprep.subr.bf16.mxu0 0
    %621 = vmatpush1.bf16.msra.mxu0 0
    %622 = vmatprep.subr.bf16.mxu0 0
    %623 = vmatpush1.bf16.msra.mxu0 0
    %624 = vmatprep.subr.bf16.mxu0 0
    %625 = vmatpush1.bf16.msra.mxu0 0
    %626 = vmatprep.subr.bf16.mxu0 0
    %627 = vmatpush1.bf16.msra.mxu0 0
    %628 = vmatprep.subr.bf16.mxu0 0
    %629 = vmatpush1.bf16.msra.mxu0 0
    %630 = vmatprep.subr.bf16.mxu0 0
    %631 = vmatpush1.bf16.msra.mxu0 0
    %632 = vmatprep.subr.bf16.mxu0 0
    %633 = vmatpush1.bf16.msra.mxu0 %v613
    %634 = vmatprep.subr.bf16.mxu0 0
    %635 = vmatpush1.bf16.msra.mxu0 %v612
    %636 = vmatprep.subr.bf16.mxu0 0
    %637 = vmatpush2.bf16.msra.mxu0 0
    %638 = vmatprep.subr.bf16.mxu0 0
    %639 = vmatpush2.bf16.msra.mxu0 0
    %640 = vmatprep.subr.bf16.mxu0 0
    %641 = vmatpush2.bf16.msra.mxu0 0
    %642 = vmatprep.subr.bf16.mxu0 0
    %643 = vmatpush2.bf16.msra.mxu0 0
    %644 = vmatprep.subr.bf16.mxu0 0
    %645 = vmatpush2.bf16.msra.mxu0 0
    %646 = vmatprep.subr.bf16.mxu0 0
    %647 = vmatpush2.bf16.msra.mxu0 0
    %648 = vmatprep.subr.bf16.mxu0 0
    %649 = vmatpush2.bf16.msra.mxu0 0
    %650 = vmatprep.subr.bf16.mxu0 0
    %651 = vmatpush2.bf16.msra.mxu0 0
    %652 = vmatprep.mubr.bf16.mxu0 0
    %653 = vmatmul.mubr.bf16.gmra.mxu0 %v618
    %v654 = vpop.f32.mrf.mxu0
    %v655 = vadd.f32 %v602, %v654
    %v656 = vpop.f32.mrf.mxu0
    %v657 = vpop.f32.mrf.mxu0
    %v658 = vpop.f32.mrf.mxu0
    %659 = vdwg.mxu0
    %vm660 = vcmask 74752
    %v661 = vsel %vm660, %v655, -inf
    %662 = vmax.xlane.f32.xlu0 %v661
    %v663 = vpop.xlane.xlu0 %662
    %v664 = vsub.f32 %v655, %v663
    %v665 = vmul.f32 %v664, 1.442695
    %v666 = vpow.pop %v665
    %v667 = vsel %vm660, %v666, 0.0
    %668 = vadd.xlane.f32.xlu0 %v667
    %v669 = vpop.xlane.xlu0 %668
    %v670 = vrcp.pop %v669
    %v671 = vmul.f32 %v666, %v670
    %672 = vst.msk [vmem:[#allocation2] sm:$0x3] %vm660, %v671
    // Predicated region
    $region22: #{_lambda_.3} parent=1 // pred_check
      _
    $region23: #{_lambda_.3} parent=1 // pred_check_branch
      %674 = sbr.rel (0) target = $region25
    $region24: #{_lambda_.3} parent=1 // pred_region
      %s676 = ssub.s32 32, 32
      %677 = vsyncadd [#allocation3], %s676
      %s679 = sshll.u32 [#allocation2], 4
      %s680 = int_to_ptr.vmem [resolvable:$true] %s679
      %682 = dma.vmem_to_hbm [thread:$0]  %s680, 32, %s5, [#allocation3]
    $region25: #{_lambda_.3} parent=1 // pred_fallthru
      _
    // Predicated region
    $region26: #{_lambda_.3} parent=1 // pred_check
      _
    $region27: #{_lambda_.3} parent=1 // pred_check_branch
      %684 = sbr.rel (0) target = $region29
    $region28: #{_lambda_.3} parent=1 // pred_region
      %685 = dma.done [#allocation3], 32
    $region29: #{_lambda_.3} parent=1 // pred_fallthru
      _
    %686 = vsyncpa [#allocation3], 1

</llo_original>
